<compile_context>
chip_gen: v7x
topology: tpu7x:2x2x1
jax: 0.10.0
libtpu: 0.0.40
codegen_flags: <defaults>
</compile_context>

<pallas_src>
import jax
import jax.numpy as jnp
from jax import lax
from jax.experimental import pallas as pl
from jax.experimental.pallas import tpu as pltpu


def _make_kernel(N, C1, inv_spatial, inv_mean):
    def kernel(x_ref, weff_ref, b1_ref, w2s_ref, b2s_ref, o_ref, acc_ref):
        k = pl.program_id(0)

        @pl.when(k == 0)
        def _():
            acc_ref[...] = jnp.zeros_like(acc_ref)

        # Streaming MXU matmul over the K (= Cin*H*W) grid axis.
        acc_ref[...] += jnp.dot(x_ref[...], weff_ref[...],
                                preferred_element_type=jnp.float32)

        @pl.when(k == pl.num_programs(0) - 1)
        def _():
            # conv1 spatial mean (+bias, commutes with the mean), -5.6, relu
            v2 = acc_ref[...] * inv_spatial + b1_ref[...]            # (N, C1)
            v5 = jnp.maximum(v2 - 5.6, 0.0)                          # (N, C1)
            # conv2 centre tap + output-channel sum folded into one column
            v8 = jnp.dot(v5, w2s_ref[...],
                         preferred_element_type=jnp.float32)         # (N, 1)
            tot = jnp.sum(v8, axis=0, keepdims=True) + float(N) * b2s_ref[...]
            o_ref[...] = jnp.maximum(tot * inv_mean - 7.0, 0.0)      # (1, 1)

    return kernel


def model_forward(x, w1, b1, w2, b2, *, tk_max=32 * 1024):
    """x: (N, 3, H, W) NCHW float32 (like the PyTorch module)."""
    N, Cin, H, W = x.shape
    C1, Cin_w, KH, KW = w1.shape
    C2 = w2.shape[0]
    S, P = 2, 1                                   # stride / padding of both convs
    assert (Cin_w, KH, KW) == (Cin, 3, 3), "conv1 must be 3x3 on Cin channels"
    assert w2.shape[1:] == (C1, 3, 3), "conv2 must be 3x3 on C1 channels"
    Ho = (H + 2 * P - KH) // S + 1
    Wo = (W + 2 * P - KW) // S + 1
    HW = H * W
    K = Cin * HW

    # ------------- wrapper-side weight-only folds (exact math) -------------
    # mask[s, kh, kw] = 1 iff padded position (r, c) of flat index s is touched
    # by tap (kh, kw) of some stride-2 output window.  Border-pad rows/cols
    # never appear in (r, c), so zero padding is handled implicitly.
    s_idx = jnp.arange(HW, dtype=jnp.int32)
    r = s_idx // W + P                                            # padded row in [1, H]
    c = s_idx % W + P                                             # padded col in [1, W]
    khs = jnp.arange(KH, dtype=jnp.int32)
    kws = jnp.arange(KW, dtype=jnp.int32)
    ok_r = ((r[:, None] >= khs[None, :])
            & (r[:, None] <= khs[None, :] + S * (Ho - 1))
            & (((r[:, None] - khs[None, :]) % S) == 0))           # (HW, KH)
    ok_c = ((c[:, None] >= kws[None, :])
            & (c[:, None] <= kws[None, :] + S * (Wo - 1))
            & (((c[:, None] - kws[None, :]) % S) == 0))           # (HW, KW)
    mask = (ok_r[:, :, None] & ok_c[:, None, :]).astype(jnp.float32)  # (HW, KH, KW)

    # Weff[ci*HW + s, c1] = sum_{kh,kw} mask[s,kh,kw] * w1[c1,ci,kh,kw]
    w1t = jnp.transpose(w1, (1, 2, 3, 0)).astype(jnp.float32)     # (Cin, KH, KW, C1)
    weff = jnp.einsum('skl,iklo->iso', mask, w1t).reshape(K, C1)  # (Cin*HW, C1)

    b1r = b1.reshape(1, C1).astype(jnp.float32)
    # conv2 on a 1x1 "image" (pad=1, stride=2) == centre tap only; fold the
    # output-channel sum into a single (C1, 1) column + scalar bias sum.
    w2s = jnp.sum(w2[:, :, 1, 1], axis=0).reshape(C1, 1).astype(jnp.float32)
    b2s = jnp.sum(b2).reshape(1, 1).astype(jnp.float32)

    x2 = x.reshape(N, K).astype(jnp.float32)                      # lane-dense, free

    # ------------- K-grid tiling (v7x-safe ~2 MiB weight slabs) -------------
    tk = max(128, min((K // 128) * 128 if K >= 128 else 128, tk_max))
    kp = pl.cdiv(K, tk) * tk
    if kp != K:                                                   # zero pad contributes 0
        x2 = jnp.pad(x2, ((0, 0), (0, kp - K)))
        weff = jnp.pad(weff, ((0, kp - K), (0, 0)))
    num_k = kp // tk

    kernel = _make_kernel(N, C1, 1.0 / float(Ho * Wo), 1.0 / float(N * C2))

    out = pl.pallas_call(
        kernel,
        out_shape=jax.ShapeDtypeStruct((1, 1), jnp.float32),
        grid=(num_k,),
        in_specs=[
            pl.BlockSpec((N, tk), lambda k: (0, k)),      # x block (lane-dense K)
            pl.BlockSpec((tk, C1), lambda k: (k, 0)),     # Weff block
            pl.BlockSpec((1, C1), lambda k: (0, 0)),      # b1
            pl.BlockSpec((C1, 1), lambda k: (0, 0)),      # folded conv2 column
            pl.BlockSpec((1, 1), lambda k: (0, 0)),       # folded conv2 bias sum
        ],
        out_specs=pl.BlockSpec((1, 1), lambda k: (0, 0)),
        scratch_shapes=[pltpu.VMEM((N, C1), jnp.float32)],
        compiler_params=pltpu.CompilerParams(
            dimension_semantics=("arbitrary",),           # K is a reduction axis
            vmem_limit_bytes=32 * 1024 * 1024),
        cost_estimate=pl.CostEstimate(
            flops=2 * N * kp * C1 + 2 * N * C1,
            transcendentals=0,
            bytes_accessed=4 * (x2.size + weff.size + C1 + C1 + 1 + 1)),
    )(x2, weff, b1r, w2s, b2s)
    return out[0, 0]   # 0-d scalar, matching torch's result


def reference_forward(x, w1, b1, w2, b2):
    """Pure-JAX reference of the (interpreted) PyTorch forward."""
    dn1 = lax.conv_dimension_numbers(x.shape, w1.shape, ('NCHW', 'OIHW', 'NCHW'))
    v1 = lax.conv_general_dilated(x, w1, (2, 2), ((1, 1), (1, 1)),
                                  dimension_numbers=dn1) + b1[None, :, None, None]
    v2 = jnp.mean(v1, axis=(-1, -2))
    v5 = jnp.maximum(v2 - 5.6, 0.0)
    v5img = v5[:, :, None, None]
    dn2 = lax.conv_dimension_numbers(v5img.shape, w2.shape, ('NCHW', 'OIHW', 'NCHW'))
    v6 = lax.conv_general_dilated(v5img, w2, (2, 2), ((1, 1), (1, 1)),
                                  dimension_numbers=dn2) + b2[None, :, None, None]
    v7 = jnp.sum(v6, axis=(-1, -2))
    v9 = jnp.mean(v7, axis=(-1, -2))
    return jnp.maximum(v9 - 7.0, 0.0)


if __name__ == "__main__":
    key = jax.random.PRNGKey(0)
    k1, k2, k3 = jax.random.split(key, 3)

    # small shapes consistent with the module (Cin must be 3)
    N, Cin, H, W = 2, 3, 32, 32
    C1, C2 = 16, 8

    x = jax.random.normal(k1, (N, Cin, H, W), jnp.float32)

    # deterministic synthetic parameters (not a checkpoint load)
    w1 = 0.5 * jax.random.normal(k2, (C1, Cin, 3, 3), jnp.float32)
    b1 = jnp.linspace(0.0, 8.0, C1, dtype=jnp.float32)
    w2 = 0.5 * jax.random.normal(k3, (C2, C1, 3, 3), jnp.float32)
    b2 = jnp.linspace(6.0, 12.0, C2, dtype=jnp.float32)

    out = jax.block_until_ready(model_forward(x, w1, b1, w2, b2))
    ref = jax.block_until_ready(reference_forward(x, w1, b1, w2, b2))

    assert out.shape == (), out.shape
    assert jnp.allclose(out, ref, atol=1e-4, rtol=1e-4), (out, ref)
    print("KERNEL_OK")
</pallas_src>

<mosaic_0001>
module attributes {stable_mosaic.version = 11 : i64} {
  func.func @kernel(%arg0: i32, %arg1: memref<2x3072xf32, #tpu.memory_space<vmem>>, %arg2: memref<3072x16xf32, #tpu.memory_space<vmem>>, %arg3: memref<1x16xf32, #tpu.memory_space<vmem>>, %arg4: memref<16x1xf32, #tpu.memory_space<vmem>>, %arg5: memref<1x1xf32, #tpu.memory_space<vmem>>, %arg6: memref<1x1xf32, #tpu.memory_space<vmem>>, %arg7: memref<2x16xf32, #tpu.memory_space<vmem>>) attributes {dimension_semantics = [#tpu.dimension_semantics<arbitrary>], iteration_bounds = array<i64: 1>, scalar_prefetch = 0 : i64, scratch_operands = 1 : i64, tpu.core_type = #tpu.core_type<tc>, window_params = [{transform_indices = @transform_0, window_bounds = array<i64: 2, 3072>}, {transform_indices = @transform_1, window_bounds = array<i64: 3072, 16>}, {pipeline_mode = #tpu.pipeline_mode<synchronous>, transform_indices = @transform_2, window_bounds = array<i64: 1, 16>}, {pipeline_mode = #tpu.pipeline_mode<synchronous>, transform_indices = @transform_3, window_bounds = array<i64: 16, 1>}, {pipeline_mode = #tpu.pipeline_mode<synchronous>, transform_indices = @transform_4, window_bounds = array<i64: 1, 1>}, {pipeline_mode = #tpu.pipeline_mode<synchronous>, transform_indices = @transform_5, window_bounds = array<i64: 1, 1>}]} {
    %c0_i32 = arith.constant 0 : i32
    %0 = arith.cmpi eq, %arg0, %c0_i32 : i32
    %1 = arith.extui %0 : i1 to i32
    %c0_i32_0 = arith.constant 0 : i32
    %2 = arith.cmpi ne, %1, %c0_i32_0 : i32
    scf.if %2 {
      %cst_10 = arith.constant 0.000000e+00 : f32
      %12 = vector.broadcast %cst_10 : f32 to vector<2x16xf32>
      %c0_11 = arith.constant 0 : index
      %c0_12 = arith.constant 0 : index
      %13 = vector.load %arg7[%c0_11, %c0_12] : memref<2x16xf32, #tpu.memory_space<vmem>>, vector<2x16xf32>
      tpu.vector_store %arg7[%c0_11, %c0_12], %12 {strides = array<i32>} : memref<2x16xf32, #tpu.memory_space<vmem>>, vector<2x16xf32>,
    } else {
    }
    %c0 = arith.constant 0 : index
    %c0_1 = arith.constant 0 : index
    %3 = vector.load %arg7[%c0, %c0_1] : memref<2x16xf32, #tpu.memory_space<vmem>>, vector<2x16xf32>
    %c0_2 = arith.constant 0 : index
    %c0_3 = arith.constant 0 : index
    %4 = vector.load %arg1[%c0_2, %c0_3] : memref<2x3072xf32, #tpu.memory_space<vmem>>, vector<2x3072xf32>
    %c0_4 = arith.constant 0 : index
    %c0_5 = arith.constant 0 : index
    %5 = vector.load %arg2[%c0_4, %c0_5] : memref<3072x16xf32, #tpu.memory_space<vmem>>, vector<3072x16xf32>
    %cst = arith.constant dense<0.000000e+00> : vector<2x16xf32>
    %6 = tpu.matmul %4, %5, %cst {dimension_numbers = #tpu.dot_dimension_numbers<[1], [0], [0], [1], [0, 0, 1, 1], [], []>} : vector<2x3072xf32>, vector<3072x16xf32>, vector<2x16xf32> -> vector<2x16xf32>
    %7 = arith.addf %3, %6 : vector<2x16xf32>
    %c0_6 = arith.constant 0 : index
    %c0_7 = arith.constant 0 : index
    %8 = vector.load %arg7[%c0_6, %c0_7] : memref<2x16xf32, #tpu.memory_space<vmem>>, vector<2x16xf32>
    tpu.vector_store %arg7[%c0_6, %c0_7], %7 {strides = array<i32>} : memref<2x16xf32, #tpu.memory_space<vmem>>, vector<2x16xf32>,
    %c0_i32_8 = arith.constant 0 : i32
    %9 = arith.cmpi eq, %arg0, %c0_i32_8 : i32
    %10 = arith.extui %9 : i1 to i32
    %c0_i32_9 = arith.constant 0 : i32
    %11 = arith.cmpi ne, %10, %c0_i32_9 : i32
    scf.if %11 {
      %c0_10 = arith.constant 0 : index
      %c0_11 = arith.constant 0 : index
      %12 = vector.load %arg7[%c0_10, %c0_11] : memref<2x16xf32, #tpu.memory_space<vmem>>, vector<2x16xf32>
      %cst_12 = arith.constant 3.906250e-03 : f32
      %13 = vector.broadcast %cst_12 : f32 to vector<2x16xf32>
      %14 = arith.mulf %12, %13 : vector<2x16xf32>
      %c0_13 = arith.constant 0 : index
      %c0_14 = arith.constant 0 : index
      %15 = vector.load %arg3[%c0_13, %c0_14] : memref<1x16xf32, #tpu.memory_space<vmem>>, vector<1x16xf32>
      %16 = vector.broadcast %15 : vector<1x16xf32> to vector<2x16xf32>
      %17 = arith.addf %14, %16 : vector<2x16xf32>
      %cst_15 = arith.constant 5.600000e+00 : f32
      %18 = vector.broadcast %cst_15 : f32 to vector<2x16xf32>
      %19 = arith.subf %17, %18 : vector<2x16xf32>
      %cst_16 = arith.constant 0.000000e+00 : f32
      %20 = vector.broadcast %cst_16 : f32 to vector<2x16xf32>
      %21 = arith.maximumf %19, %20 : vector<2x16xf32>
      %c0_17 = arith.constant 0 : index
      %c0_18 = arith.constant 0 : index
      %22 = vector.load %arg4[%c0_17, %c0_18] : memref<16x1xf32, #tpu.memory_space<vmem>>, vector<16x1xf32>
      %cst_19 = arith.constant dense<0.000000e+00> : vector<2x1xf32>
      %23 = tpu.matmul %21, %22, %cst_19 {dimension_numbers = #tpu.dot_dimension_numbers<[1], [0], [0], [1], [0, 0, 1, 1], [], []>} : vector<2x16xf32>, vector<16x1xf32>, vector<2x1xf32> -> vector<2x1xf32>
      %cst_20 = arith.constant dense<0.000000e+00> : vector<1xf32>
      %24 = vector.multi_reduction <add>, %23, %cst_20 [0] : vector<2x1xf32> to vector<1xf32>
      %25 = vector.shape_cast %24 : vector<1xf32> to vector<1x1xf32>
      %c0_21 = arith.constant 0 : index
      %c0_22 = arith.constant 0 : index
      %26 = vector.load %arg5[%c0_21, %c0_22] : memref<1x1xf32, #tpu.memory_space<vmem>>, vector<1x1xf32>
      %cst_23 = arith.constant 2.000000e+00 : f32
      %27 = vector.broadcast %cst_23 : f32 to vector<1x1xf32>
      %28 = arith.mulf %27, %26 : vector<1x1xf32>
      %29 = arith.addf %25, %28 : vector<1x1xf32>
      %cst_24 = arith.constant 6.250000e-02 : f32
      %30 = vector.broadcast %cst_24 : f32 to vector<1x1xf32>
      %31 = arith.mulf %29, %30 : vector<1x1xf32>
      %cst_25 = arith.constant 7.000000e+00 : f32
      %32 = vector.broadcast %cst_25 : f32 to vector<1x1xf32>
      %33 = arith.subf %31, %32 : vector<1x1xf32>
      %cst_26 = arith.constant 0.000000e+00 : f32
      %34 = vector.broadcast %cst_26 : f32 to vector<1x1xf32>
      %35 = arith.maximumf %33, %34 : vector<1x1xf32>
      %c0_27 = arith.constant 0 : index
      %c0_28 = arith.constant 0 : index
      %36 = vector.load %arg6[%c0_27, %c0_28] : memref<1x1xf32, #tpu.memory_space<vmem>>, vector<1x1xf32>
      tpu.vector_store %arg6[%c0_27, %c0_28], %35 {strides = array<i32>} : memref<1x1xf32, #tpu.memory_space<vmem>>, vector<1x1xf32>,
    } else {
    }
    return
  }
  func.func @transform_0(%arg0: i32) -> (i32, i32) {
    %c0_i32 = arith.constant 0 : i32
    %c0_i32_0 = arith.constant 0 : i32
    return %c0_i32, %arg0 : i32, i32
  }
  func.func @transform_1(%arg0: i32) -> (i32, i32) {
    %c0_i32 = arith.constant 0 : i32
    %c0_i32_0 = arith.constant 0 : i32
    return %arg0, %c0_i32 : i32, i32
  }
  func.func @transform_2(%arg0: i32) -> (i32, i32) {
    %c0_i32 = arith.constant 0 : i32
    %c0_i32_0 = arith.constant 0 : i32
    %c0_i32_1 = arith.constant 0 : i32
    return %c0_i32, %c0_i32_0 : i32, i32
  }
  func.func @transform_3(%arg0: i32) -> (i32, i32) {
    %c0_i32 = arith.constant 0 : i32
    %c0_i32_0 = arith.constant 0 : i32
    %c0_i32_1 = arith.constant 0 : i32
    return %c0_i32, %c0_i32_0 : i32, i32
  }
  func.func @transform_4(%arg0: i32) -> (i32, i32) {
    %c0_i32 = arith.constant 0 : i32
    %c0_i32_0 = arith.constant 0 : i32
    %c0_i32_1 = arith.constant 0 : i32
    return %c0_i32, %c0_i32_0 : i32, i32
  }
  func.func @transform_5(%arg0: i32) -> (i32, i32) {
    %c0_i32 = arith.constant 0 : i32
    %c0_i32_0 = arith.constant 0 : i32
    %c0_i32_1 = arith.constant 0 : i32
    return %c0_i32, %c0_i32_0 : i32, i32
  }
}

</mosaic_0001>

<llo_original>
// kernel: tpu_custom_call.1
$region0: #{tpu_custom_call.1}
  #allocation0 [shape = 'u32[]', space=smem, size = 0x4, offset = 0x4, fixed_abs, tag = 'smem constant byte address 0x4 - core index']
  #allocation1 [shape = 'u32[144,128]{1,0:T(1,128)}', space=vmem, size = 0x12000, scoped, tag = 'internal scratch']
  #allocation2 [shape = 'f32[2,16]{1,0:T(2,128)}', space=vmem, size = 0x400, scoped, tag = 'scratch operand']
  #allocation3 [shape = 'f32[1,1]{1,0:T(1,128)S(1)}', space=vmem, size = 0x200, scoped, tag = 'scoped memory for tpu_custom_call.1']
  %s0 = inlined_call_operand.vmem [shape: f32[2,3072], index: 0, kind: input, shape index: {}]
  %s1 = inlined_call_operand.vmem [shape: f32[3072,16], index: 1, kind: input, shape index: {}]
  %s2 = inlined_call_operand.vmem [shape: f32[1,16], index: 2, kind: input, shape index: {}]
  %s3 = inlined_call_operand.vmem [shape: f32[16,1], index: 3, kind: input, shape index: {}]
  %s4 = inlined_call_operand.<no memory space> [shape: f32[1,1], index: 4, kind: input, shape index: {}]
  %s5 = inlined_call_operand.hbm [shape: f32[1,1], index: 5, kind: output, shape index: {}]
  %s6 = sld [smem:[#allocation0]]
  $region38: #{tpu_custom_call.1} parent=0
    _
  %s8 = ssub.s32 1, %s6
  %s9 = scalar_select 0, %s8, %s6
  %v10 = vstv %s4
  %11 = vst [vmem:[#allocation3] sm:$0x1] %v10
  $region1: #{tpu_custom_call.1} parent=0
    #allocation4 [shape = 'u8[512]{0}', space=vmem, size = 0x400, scoped, tag = 'output window, operand 0, single buffered']
    #allocation5 [shape = 's32[1]{0}', space=sflag, size = 0x4, scoped, tag = 'scoped memory for tpu_custom_call.1']
    %12 = vsyncpa [#allocation5], 0
    // Predicated region
    $region2: #{tpu_custom_call.1} parent=1 // pred_check
      _
    $region3: #{tpu_custom_call.1} parent=1 // pred_check_branch
      %14 = sbr.rel (0) target = $region5
    $region4: #{tpu_custom_call.1} parent=1 // pred_region
      _
    $region5: #{tpu_custom_call.1} parent=1 // pred_fallthru
      _
    // Predicated region
    $region6: #{tpu_custom_call.1} parent=1 // pred_check
      _
    $region7: #{tpu_custom_call.1} parent=1 // pred_check_branch
      %16 = sbr.rel (0) target = $region9
    $region8: #{tpu_custom_call.1} parent=1 // pred_region
      _
    $region9: #{tpu_custom_call.1} parent=1 // pred_fallthru
      _
    // Predicated region
    $region10: #{tpu_custom_call.1} parent=1 // pred_check
      _
    $region11: #{tpu_custom_call.1} parent=1 // pred_check_branch
      %18 = sbr.rel (0) target = $region13
    $region12: #{tpu_custom_call.1} parent=1 // pred_region
      _
    $region13: #{tpu_custom_call.1} parent=1 // pred_fallthru
      _
    // Predicated region
    $region14: #{tpu_custom_call.1} parent=1 // pred_check
      _
    $region15: #{tpu_custom_call.1} parent=1 // pred_check_branch
      %20 = sbr.rel (0) target = $region17
    $region16: #{tpu_custom_call.1} parent=1 // pred_region
      _
    $region17: #{tpu_custom_call.1} parent=1 // pred_fallthru
      _
    // Predicated region
    $region18: #{tpu_custom_call.1} parent=1 // pred_check
      _
    $region19: #{tpu_custom_call.1} parent=1 // pred_check_branch
      %22 = sbr.rel (0) target = $region21
    $region20: #{tpu_custom_call.1} parent=1 // pred_region
      _
    $region21: #{tpu_custom_call.1} parent=1 // pred_fallthru
      _
    %p23 = scmp.eq.s32.totalorder 0, 0
    // Predicated region
    $region22: #{tpu_custom_call.1} parent=1 // pred_check
      %p24 = pneg %p23
    $region23: #{tpu_custom_call.1} parent=1 // pred_check_branch
      %26 = sbr.rel (%p24) target = $region25
    $region24: #{tpu_custom_call.1} parent=1 // pred_region
      %vm27 = vcmask 123904
      %28 = vst.msk [vmem:[#allocation2] sm:$0x3] %vm27, 0.0
    $region25: #{tpu_custom_call.1} parent=1 // pred_fallthru
      _
    %v29 = vld [vmem:[#allocation2] sm:$0x3]
    %v30 = vld [vmem:[%s0] sm:$0xff]
    %v31 = vld [vmem:[%s0 + $0x8] sm:$0xff]
    %v32 = vld [vmem:[%s0 + $0x10] sm:$0xff]
    %v33 = vld [vmem:[%s0 + $0x18] sm:$0xff]
    %v34 = vld [vmem:[%s0 + $0x20] sm:$0xff]
    %v35 = vld [vmem:[%s0 + $0x28] sm:$0xff]
    %v36 = vld [vmem:[%s1] sm:$0xff]
    %v37 = vld [vmem:[%s1 + $0x8] sm:$0xff]
    %v38 = vld [vmem:[%s1 + $0x10] sm:$0xff]
    %v39 = vld [vmem:[%s1 + $0x18] sm:$0xff]
    %v40 = vld [vmem:[%s1 + $0x20] sm:$0xff]
    %v41 = vld [vmem:[%s1 + $0x28] sm:$0xff]
    %v42 = vld [vmem:[%s1 + $0x30] sm:$0xff]
    %v43 = vld [vmem:[%s1 + $0x38] sm:$0xff]
    %v44 = vld [vmem:[%s1 + $0x40] sm:$0xff]
    %v45 = vld [vmem:[%s1 + $0x48] sm:$0xff]
    %v46 = vld [vmem:[%s1 + $0x50] sm:$0xff]
    %v47 = vld [vmem:[%s1 + $0x58] sm:$0xff]
    %v48 = vld [vmem:[%s1 + $0x60] sm:$0xff]
    %v49 = vld [vmem:[%s1 + $0x68] sm:$0xff]
    %v50 = vld [vmem:[%s1 + $0x70] sm:$0xff]
    %v51 = vld [vmem:[%s1 + $0x78] sm:$0xff]
    %v52 = vld [vmem:[%s1 + $0x80] sm:$0xff]
    %v53 = vld [vmem:[%s1 + $0x88] sm:$0xff]
    %v54 = vld [vmem:[%s1 + $0x90] sm:$0xff]
    %v55 = vld [vmem:[%s1 + $0x98] sm:$0xff]
    %v56 = vld [vmem:[%s1 + $0xa0] sm:$0xff]
    %v57 = vld [vmem:[%s1 + $0xa8] sm:$0xff]
    %v58 = vld [vmem:[%s1 + $0xb0] sm:$0xff]
    %v59 = vld [vmem:[%s1 + $0xb8] sm:$0xff]
    %v60 = vld [vmem:[%s1 + $0xc0] sm:$0xff]
    %v61 = vld [vmem:[%s1 + $0xc8] sm:$0xff]
    %v62 = vld [vmem:[%s1 + $0xd0] sm:$0xff]
    %v63 = vld [vmem:[%s1 + $0xd8] sm:$0xff]
    %v64 = vld [vmem:[%s1 + $0xe0] sm:$0xff]
    %v65 = vld [vmem:[%s1 + $0xe8] sm:$0xff]
    %v66 = vld [vmem:[%s1 + $0xf0] sm:$0xff]
    %v67 = vld [vmem:[%s1 + $0xf8] sm:$0xff]
    %v68 = vld [vmem:[%s1 + $0x100] sm:$0xff]
    %v69 = vld [vmem:[%s1 + $0x108] sm:$0xff]
    %v70 = vld [vmem:[%s1 + $0x110] sm:$0xff]
    %v71 = vld [vmem:[%s1 + $0x118] sm:$0xff]
    %v72 = vld [vmem:[%s1 + $0x120] sm:$0xff]
    %v73 = vld [vmem:[%s1 + $0x128] sm:$0xff]
    %v74 = vld [vmem:[%s1 + $0x130] sm:$0xff]
    %v75 = vld [vmem:[%s1 + $0x138] sm:$0xff]
    %v76 = vld [vmem:[%s1 + $0x140] sm:$0xff]
    %v77 = vld [vmem:[%s1 + $0x148] sm:$0xff]
    %v78 = vld [vmem:[%s1 + $0x150] sm:$0xff]
    %v79 = vld [vmem:[%s1 + $0x158] sm:$0xff]
    %v80 = vld [vmem:[%s1 + $0x160] sm:$0xff]
    %v81 = vld [vmem:[%s1 + $0x168] sm:$0xff]
    %v82 = vld [vmem:[%s1 + $0x170] sm:$0xff]
    %v83 = vld [vmem:[%s1 + $0x178] sm:$0xff]
    %v84 = vld [vmem:[%s1 + $0x180] sm:$0xff]
    %v85 = vld [vmem:[%s1 + $0x188] sm:$0xff]
    %v86 = vld [vmem:[%s1 + $0x190] sm:$0xff]
    %v87 = vld [vmem:[%s1 + $0x198] sm:$0xff]
    %v88 = vld [vmem:[%s1 + $0x1a0] sm:$0xff]
    %v89 = vld [vmem:[%s1 + $0x1a8] sm:$0xff]
    %v90 = vld [vmem:[%s1 + $0x1b0] sm:$0xff]
    %v91 = vld [vmem:[%s1 + $0x1b8] sm:$0xff]
    %v92 = vld [vmem:[%s1 + $0x1c0] sm:$0xff]
    %v93 = vld [vmem:[%s1 + $0x1c8] sm:$0xff]
    %v94 = vld [vmem:[%s1 + $0x1d0] sm:$0xff]
    %v95 = vld [vmem:[%s1 + $0x1d8] sm:$0xff]
    %v96 = vld [vmem:[%s1 + $0x1e0] sm:$0xff]
    %v97 = vld [vmem:[%s1 + $0x1e8] sm:$0xff]
    %v98 = vld [vmem:[%s1 + $0x1f0] sm:$0xff]
    %v99 = vld [vmem:[%s1 + $0x1f8] sm:$0xff]
    %v100 = vld [vmem:[%s1 + $0x200] sm:$0xff]
    %v101 = vld [vmem:[%s1 + $0x208] sm:$0xff]
    %v102 = vld [vmem:[%s1 + $0x210] sm:$0xff]
    %v103 = vld [vmem:[%s1 + $0x218] sm:$0xff]
    %v104 = vld [vmem:[%s1 + $0x220] sm:$0xff]
    %v105 = vld [vmem:[%s1 + $0x228] sm:$0xff]
    %v106 = vld [vmem:[%s1 + $0x230] sm:$0xff]
    %v107 = vld [vmem:[%s1 + $0x238] sm:$0xff]
    %v108 = vld [vmem:[%s1 + $0x240] sm:$0xff]
    %v109 = vld [vmem:[%s1 + $0x248] sm:$0xff]
    %v110 = vld [vmem:[%s1 + $0x250] sm:$0xff]
    %v111 = vld [vmem:[%s1 + $0x258] sm:$0xff]
    %v112 = vld [vmem:[%s1 + $0x260] sm:$0xff]
    %v113 = vld [vmem:[%s1 + $0x268] sm:$0xff]
    %v114 = vld [vmem:[%s1 + $0x270] sm:$0xff]
    %v115 = vld [vmem:[%s1 + $0x278] sm:$0xff]
    %v116 = vld [vmem:[%s1 + $0x280] sm:$0xff]
    %v117 = vld [vmem:[%s1 + $0x288] sm:$0xff]
    %v118 = vld [vmem:[%s1 + $0x290] sm:$0xff]
    %v119 = vld [vmem:[%s1 + $0x298] sm:$0xff]
    %v120 = vld [vmem:[%s1 + $0x2a0] sm:$0xff]
    %v121 = vld [vmem:[%s1 + $0x2a8] sm:$0xff]
    %v122 = vld [vmem:[%s1 + $0x2b0] sm:$0xff]
    %v123 = vld [vmem:[%s1 + $0x2b8] sm:$0xff]
    %v124 = vld [vmem:[%s1 + $0x2c0] sm:$0xff]
    %v125 = vld [vmem:[%s1 + $0x2c8] sm:$0xff]
    %v126 = vld [vmem:[%s1 + $0x2d0] sm:$0xff]
    %v127 = vld [vmem:[%s1 + $0x2d8] sm:$0xff]
    %v128 = vld [vmem:[%s1 + $0x2e0] sm:$0xff]
    %v129 = vld [vmem:[%s1 + $0x2e8] sm:$0xff]
    %v130 = vld [vmem:[%s1 + $0x2f0] sm:$0xff]
    %v131 = vld [vmem:[%s1 + $0x2f8] sm:$0xff]
    %v132 = vld [vmem:[%s1 + $0x300] sm:$0xff]
    %v133 = vld [vmem:[%s1 + $0x308] sm:$0xff]
    %v134 = vld [vmem:[%s1 + $0x310] sm:$0xff]
    %v135 = vld [vmem:[%s1 + $0x318] sm:$0xff]
    %v136 = vld [vmem:[%s1 + $0x320] sm:$0xff]
    %v137 = vld [vmem:[%s1 + $0x328] sm:$0xff]
    %v138 = vld [vmem:[%s1 + $0x330] sm:$0xff]
    %v139 = vld [vmem:[%s1 + $0x338] sm:$0xff]
    %v140 = vld [vmem:[%s1 + $0x340] sm:$0xff]
    %v141 = vld [vmem:[%s1 + $0x348] sm:$0xff]
    %v142 = vld [vmem:[%s1 + $0x350] sm:$0xff]
    %v143 = vld [vmem:[%s1 + $0x358] sm:$0xff]
    %v144 = vld [vmem:[%s1 + $0x360] sm:$0xff]
    %v145 = vld [vmem:[%s1 + $0x368] sm:$0xff]
    %v146 = vld [vmem:[%s1 + $0x370] sm:$0xff]
    %v147 = vld [vmem:[%s1 + $0x378] sm:$0xff]
    %v148 = vld [vmem:[%s1 + $0x380] sm:$0xff]
    %v149 = vld [vmem:[%s1 + $0x388] sm:$0xff]
    %v150 = vld [vmem:[%s1 + $0x390] sm:$0xff]
    %v151 = vld [vmem:[%s1 + $0x398] sm:$0xff]
    %v152 = vld [vmem:[%s1 + $0x3a0] sm:$0xff]
    %v153 = vld [vmem:[%s1 + $0x3a8] sm:$0xff]
    %v154 = vld [vmem:[%s1 + $0x3b0] sm:$0xff]
    %v155 = vld [vmem:[%s1 + $0x3b8] sm:$0xff]
    %v156 = vld [vmem:[%s1 + $0x3c0] sm:$0xff]
    %v157 = vld [vmem:[%s1 + $0x3c8] sm:$0xff]
    %v158 = vld [vmem:[%s1 + $0x3d0] sm:$0xff]
    %v159 = vld [vmem:[%s1 + $0x3d8] sm:$0xff]
    %v160 = vld [vmem:[%s1 + $0x3e0] sm:$0xff]
    %v161 = vld [vmem:[%s1 + $0x3e8] sm:$0xff]
    %v162 = vld [vmem:[%s1 + $0x3f0] sm:$0xff]
    %v163 = vld [vmem:[%s1 + $0x3f8] sm:$0xff]
    %v164 = vld [vmem:[%s1 + $0x400] sm:$0xff]
    %v165 = vld [vmem:[%s1 + $0x408] sm:$0xff]
    %v166 = vld [vmem:[%s1 + $0x410] sm:$0xff]
    %v167 = vld [vmem:[%s1 + $0x418] sm:$0xff]
    %v168 = vld [vmem:[%s1 + $0x420] sm:$0xff]
    %v169 = vld [vmem:[%s1 + $0x428] sm:$0xff]
    %v170 = vld [vmem:[%s1 + $0x430] sm:$0xff]
    %v171 = vld [vmem:[%s1 + $0x438] sm:$0xff]
    %v172 = vld [vmem:[%s1 + $0x440] sm:$0xff]
    %v173 = vld [vmem:[%s1 + $0x448] sm:$0xff]
    %v174 = vld [vmem:[%s1 + $0x450] sm:$0xff]
    %v175 = vld [vmem:[%s1 + $0x458] sm:$0xff]
    %v176 = vld [vmem:[%s1 + $0x460] sm:$0xff]
    %v177 = vld [vmem:[%s1 + $0x468] sm:$0xff]
    %v178 = vld [vmem:[%s1 + $0x470] sm:$0xff]
    %v179 = vld [vmem:[%s1 + $0x478] sm:$0xff]
    %v180 = vld [vmem:[%s1 + $0x480] sm:$0xff]
    %v181 = vld [vmem:[%s1 + $0x488] sm:$0xff]
    %v182 = vld [vmem:[%s1 + $0x490] sm:$0xff]
    %v183 = vld [vmem:[%s1 + $0x498] sm:$0xff]
    %v184 = vld [vmem:[%s1 + $0x4a0] sm:$0xff]
    %v185 = vld [vmem:[%s1 + $0x4a8] sm:$0xff]
    %v186 = vld [vmem:[%s1 + $0x4b0] sm:$0xff]
    %v187 = vld [vmem:[%s1 + $0x4b8] sm:$0xff]
    %v188 = vld [vmem:[%s1 + $0x4c0] sm:$0xff]
    %v189 = vld [vmem:[%s1 + $0x4c8] sm:$0xff]
    %v190 = vld [vmem:[%s1 + $0x4d0] sm:$0xff]
    %v191 = vld [vmem:[%s1 + $0x4d8] sm:$0xff]
    %v192 = vld [vmem:[%s1 + $0x4e0] sm:$0xff]
    %v193 = vld [vmem:[%s1 + $0x4e8] sm:$0xff]
    %v194 = vld [vmem:[%s1 + $0x4f0] sm:$0xff]
    %v195 = vld [vmem:[%s1 + $0x4f8] sm:$0xff]
    %v196 = vld [vmem:[%s1 + $0x500] sm:$0xff]
    %v197 = vld [vmem:[%s1 + $0x508] sm:$0xff]
    %v198 = vld [vmem:[%s1 + $0x510] sm:$0xff]
    %v199 = vld [vmem:[%s1 + $0x518] sm:$0xff]
    %v200 = vld [vmem:[%s1 + $0x520] sm:$0xff]
    %v201 = vld [vmem:[%s1 + $0x528] sm:$0xff]
    %v202 = vld [vmem:[%s1 + $0x530] sm:$0xff]
    %v203 = vld [vmem:[%s1 + $0x538] sm:$0xff]
    %v204 = vld [vmem:[%s1 + $0x540] sm:$0xff]
    %v205 = vld [vmem:[%s1 + $0x548] sm:$0xff]
    %v206 = vld [vmem:[%s1 + $0x550] sm:$0xff]
    %v207 = vld [vmem:[%s1 + $0x558] sm:$0xff]
    %v208 = vld [vmem:[%s1 + $0x560] sm:$0xff]
    %v209 = vld [vmem:[%s1 + $0x568] sm:$0xff]
    %v210 = vld [vmem:[%s1 + $0x570] sm:$0xff]
    %v211 = vld [vmem:[%s1 + $0x578] sm:$0xff]
    %v212 = vld [vmem:[%s1 + $0x580] sm:$0xff]
    %v213 = vld [vmem:[%s1 + $0x588] sm:$0xff]
    %v214 = vld [vmem:[%s1 + $0x590] sm:$0xff]
    %v215 = vld [vmem:[%s1 + $0x598] sm:$0xff]
    %v216 = vld [vmem:[%s1 + $0x5a0] sm:$0xff]
    %v217 = vld [vmem:[%s1 + $0x5a8] sm:$0xff]
    %v218 = vld [vmem:[%s1 + $0x5b0] sm:$0xff]
    %v219 = vld [vmem:[%s1 + $0x5b8] sm:$0xff]
    %v220 = vld [vmem:[%s1 + $0x5c0] sm:$0xff]
    %v221 = vld [vmem:[%s1 + $0x5c8] sm:$0xff]
    %v222 = vld [vmem:[%s1 + $0x5d0] sm:$0xff]
    %v223 = vld [vmem:[%s1 + $0x5d8] sm:$0xff]
    %v224 = vld [vmem:[%s1 + $0x5e0] sm:$0xff]
    %v225 = vld [vmem:[%s1 + $0x5e8] sm:$0xff]
    %v226 = vld [vmem:[%s1 + $0x5f0] sm:$0xff]
    %v227 = vld [vmem:[%s1 + $0x5f8] sm:$0xff]
    %v228 = vld [vmem:[%s1 + $0x600] sm:$0xff]
    %v229 = vld [vmem:[%s1 + $0x608] sm:$0xff]
    %v230 = vld [vmem:[%s1 + $0x610] sm:$0xff]
    %v231 = vld [vmem:[%s1 + $0x618] sm:$0xff]
    %v232 = vld [vmem:[%s1 + $0x620] sm:$0xff]
    %v233 = vld [vmem:[%s1 + $0x628] sm:$0xff]
    %v234 = vld [vmem:[%s1 + $0x630] sm:$0xff]
    %v235 = vld [vmem:[%s1 + $0x638] sm:$0xff]
    %v236 = vld [vmem:[%s1 + $0x640] sm:$0xff]
    %v237 = vld [vmem:[%s1 + $0x648] sm:$0xff]
    %v238 = vld [vmem:[%s1 + $0x650] sm:$0xff]
    %v239 = vld [vmem:[%s1 + $0x658] sm:$0xff]
    %v240 = vld [vmem:[%s1 + $0x660] sm:$0xff]
    %v241 = vld [vmem:[%s1 + $0x668] sm:$0xff]
    %v242 = vld [vmem:[%s1 + $0x670] sm:$0xff]
    %v243 = vld [vmem:[%s1 + $0x678] sm:$0xff]
    %v244 = vld [vmem:[%s1 + $0x680] sm:$0xff]
    %v245 = vld [vmem:[%s1 + $0x688] sm:$0xff]
    %v246 = vld [vmem:[%s1 + $0x690] sm:$0xff]
    %v247 = vld [vmem:[%s1 + $0x698] sm:$0xff]
    %v248 = vld [vmem:[%s1 + $0x6a0] sm:$0xff]
    %v249 = vld [vmem:[%s1 + $0x6a8] sm:$0xff]
    %v250 = vld [vmem:[%s1 + $0x6b0] sm:$0xff]
    %v251 = vld [vmem:[%s1 + $0x6b8] sm:$0xff]
    %v252 = vld [vmem:[%s1 + $0x6c0] sm:$0xff]
    %v253 = vld [vmem:[%s1 + $0x6c8] sm:$0xff]
    %v254 = vld [vmem:[%s1 + $0x6d0] sm:$0xff]
    %v255 = vld [vmem:[%s1 + $0x6d8] sm:$0xff]
    %v256 = vld [vmem:[%s1 + $0x6e0] sm:$0xff]
    %v257 = vld [vmem:[%s1 + $0x6e8] sm:$0xff]
    %v258 = vld [vmem:[%s1 + $0x6f0] sm:$0xff]
    %v259 = vld [vmem:[%s1 + $0x6f8] sm:$0xff]
    %v260 = vld [vmem:[%s1 + $0x700] sm:$0xff]
    %v261 = vld [vmem:[%s1 + $0x708] sm:$0xff]
    %v262 = vld [vmem:[%s1 + $0x710] sm:$0xff]
    %v263 = vld [vmem:[%s1 + $0x718] sm:$0xff]
    %v264 = vld [vmem:[%s1 + $0x720] sm:$0xff]
    %v265 = vld [vmem:[%s1 + $0x728] sm:$0xff]
    %v266 = vld [vmem:[%s1 + $0x730] sm:$0xff]
    %v267 = vld [vmem:[%s1 + $0x738] sm:$0xff]
    %v268 = vld [vmem:[%s1 + $0x740] sm:$0xff]
    %v269 = vld [vmem:[%s1 + $0x748] sm:$0xff]
    %v270 = vld [vmem:[%s1 + $0x750] sm:$0xff]
    %v271 = vld [vmem:[%s1 + $0x758] sm:$0xff]
    %v272 = vld [vmem:[%s1 + $0x760] sm:$0xff]
    %v273 = vld [vmem:[%s1 + $0x768] sm:$0xff]
    %v274 = vld [vmem:[%s1 + $0x770] sm:$0xff]
    %v275 = vld [vmem:[%s1 + $0x778] sm:$0xff]
    %v276 = vld [vmem:[%s1 + $0x780] sm:$0xff]
    %v277 = vld [vmem:[%s1 + $0x788] sm:$0xff]
    %v278 = vld [vmem:[%s1 + $0x790] sm:$0xff]
    %v279 = vld [vmem:[%s1 + $0x798] sm:$0xff]
    %v280 = vld [vmem:[%s1 + $0x7a0] sm:$0xff]
    %v281 = vld [vmem:[%s1 + $0x7a8] sm:$0xff]
    %v282 = vld [vmem:[%s1 + $0x7b0] sm:$0xff]
    %v283 = vld [vmem:[%s1 + $0x7b8] sm:$0xff]
    %v284 = vld [vmem:[%s1 + $0x7c0] sm:$0xff]
    %v285 = vld [vmem:[%s1 + $0x7c8] sm:$0xff]
    %v286 = vld [vmem:[%s1 + $0x7d0] sm:$0xff]
    %v287 = vld [vmem:[%s1 + $0x7d8] sm:$0xff]
    %v288 = vld [vmem:[%s1 + $0x7e0] sm:$0xff]
    %v289 = vld [vmem:[%s1 + $0x7e8] sm:$0xff]
    %v290 = vld [vmem:[%s1 + $0x7f0] sm:$0xff]
    %v291 = vld [vmem:[%s1 + $0x7f8] sm:$0xff]
    %v292 = vld [vmem:[%s1 + $0x800] sm:$0xff]
    %v293 = vld [vmem:[%s1 + $0x808] sm:$0xff]
    %v294 = vld [vmem:[%s1 + $0x810] sm:$0xff]
    %v295 = vld [vmem:[%s1 + $0x818] sm:$0xff]
    %v296 = vld [vmem:[%s1 + $0x820] sm:$0xff]
    %v297 = vld [vmem:[%s1 + $0x828] sm:$0xff]
    %v298 = vld [vmem:[%s1 + $0x830] sm:$0xff]
    %v299 = vld [vmem:[%s1 + $0x838] sm:$0xff]
    %v300 = vld [vmem:[%s1 + $0x840] sm:$0xff]
    %v301 = vld [vmem:[%s1 + $0x848] sm:$0xff]
    %v302 = vld [vmem:[%s1 + $0x850] sm:$0xff]
    %v303 = vld [vmem:[%s1 + $0x858] sm:$0xff]
    %v304 = vld [vmem:[%s1 + $0x860] sm:$0xff]
    %v305 = vld [vmem:[%s1 + $0x868] sm:$0xff]
    %v306 = vld [vmem:[%s1 + $0x870] sm:$0xff]
    %v307 = vld [vmem:[%s1 + $0x878] sm:$0xff]
    %v308 = vld [vmem:[%s1 + $0x880] sm:$0xff]
    %v309 = vld [vmem:[%s1 + $0x888] sm:$0xff]
    %v310 = vld [vmem:[%s1 + $0x890] sm:$0xff]
    %v311 = vld [vmem:[%s1 + $0x898] sm:$0xff]
    %v312 = vld [vmem:[%s1 + $0x8a0] sm:$0xff]
    %v313 = vld [vmem:[%s1 + $0x8a8] sm:$0xff]
    %v314 = vld [vmem:[%s1 + $0x8b0] sm:$0xff]
    %v315 = vld [vmem:[%s1 + $0x8b8] sm:$0xff]
    %v316 = vld [vmem:[%s1 + $0x8c0] sm:$0xff]
    %v317 = vld [vmem:[%s1 + $0x8c8] sm:$0xff]
    %v318 = vld [vmem:[%s1 + $0x8d0] sm:$0xff]
    %v319 = vld [vmem:[%s1 + $0x8d8] sm:$0xff]
    %v320 = vld [vmem:[%s1 + $0x8e0] sm:$0xff]
    %v321 = vld [vmem:[%s1 + $0x8e8] sm:$0xff]
    %v322 = vld [vmem:[%s1 + $0x8f0] sm:$0xff]
    %v323 = vld [vmem:[%s1 + $0x8f8] sm:$0xff]
    %v324 = vld [vmem:[%s1 + $0x900] sm:$0xff]
    %v325 = vld [vmem:[%s1 + $0x908] sm:$0xff]
    %v326 = vld [vmem:[%s1 + $0x910] sm:$0xff]
    %v327 = vld [vmem:[%s1 + $0x918] sm:$0xff]
    %v328 = vld [vmem:[%s1 + $0x920] sm:$0xff]
    %v329 = vld [vmem:[%s1 + $0x928] sm:$0xff]
    %v330 = vld [vmem:[%s1 + $0x930] sm:$0xff]
    %v331 = vld [vmem:[%s1 + $0x938] sm:$0xff]
    %v332 = vld [vmem:[%s1 + $0x940] sm:$0xff]
    %v333 = vld [vmem:[%s1 + $0x948] sm:$0xff]
    %v334 = vld [vmem:[%s1 + $0x950] sm:$0xff]
    %v335 = vld [vmem:[%s1 + $0x958] sm:$0xff]
    %v336 = vld [vmem:[%s1 + $0x960] sm:$0xff]
    %v337 = vld [vmem:[%s1 + $0x968] sm:$0xff]
    %v338 = vld [vmem:[%s1 + $0x970] sm:$0xff]
    %v339 = vld [vmem:[%s1 + $0x978] sm:$0xff]
    %v340 = vld [vmem:[%s1 + $0x980] sm:$0xff]
    %v341 = vld [vmem:[%s1 + $0x988] sm:$0xff]
    %v342 = vld [vmem:[%s1 + $0x990] sm:$0xff]
    %v343 = vld [vmem:[%s1 + $0x998] sm:$0xff]
    %v344 = vld [vmem:[%s1 + $0x9a0] sm:$0xff]
    %v345 = vld [vmem:[%s1 + $0x9a8] sm:$0xff]
    %v346 = vld [vmem:[%s1 + $0x9b0] sm:$0xff]
    %v347 = vld [vmem:[%s1 + $0x9b8] sm:$0xff]
    %v348 = vld [vmem:[%s1 + $0x9c0] sm:$0xff]
    %v349 = vld [vmem:[%s1 + $0x9c8] sm:$0xff]
    %v350 = vld [vmem:[%s1 + $0x9d0] sm:$0xff]
    %v351 = vld [vmem:[%s1 + $0x9d8] sm:$0xff]
    %v352 = vld [vmem:[%s1 + $0x9e0] sm:$0xff]
    %v353 = vld [vmem:[%s1 + $0x9e8] sm:$0xff]
    %v354 = vld [vmem:[%s1 + $0x9f0] sm:$0xff]
    %v355 = vld [vmem:[%s1 + $0x9f8] sm:$0xff]
    %v356 = vld [vmem:[%s1 + $0xa00] sm:$0xff]
    %v357 = vld [vmem:[%s1 + $0xa08] sm:$0xff]
    %v358 = vld [vmem:[%s1 + $0xa10] sm:$0xff]
    %v359 = vld [vmem:[%s1 + $0xa18] sm:$0xff]
    %v360 = vld [vmem:[%s1 + $0xa20] sm:$0xff]
    %v361 = vld [vmem:[%s1 + $0xa28] sm:$0xff]
    %v362 = vld [vmem:[%s1 + $0xa30] sm:$0xff]
    %v363 = vld [vmem:[%s1 + $0xa38] sm:$0xff]
    %v364 = vld [vmem:[%s1 + $0xa40] sm:$0xff]
    %v365 = vld [vmem:[%s1 + $0xa48] sm:$0xff]
    %v366 = vld [vmem:[%s1 + $0xa50] sm:$0xff]
    %v367 = vld [vmem:[%s1 + $0xa58] sm:$0xff]
    %v368 = vld [vmem:[%s1 + $0xa60] sm:$0xff]
    %v369 = vld [vmem:[%s1 + $0xa68] sm:$0xff]
    %v370 = vld [vmem:[%s1 + $0xa70] sm:$0xff]
    %v371 = vld [vmem:[%s1 + $0xa78] sm:$0xff]
    %v372 = vld [vmem:[%s1 + $0xa80] sm:$0xff]
    %v373 = vld [vmem:[%s1 + $0xa88] sm:$0xff]
    %v374 = vld [vmem:[%s1 + $0xa90] sm:$0xff]
    %v375 = vld [vmem:[%s1 + $0xa98] sm:$0xff]
    %v376 = vld [vmem:[%s1 + $0xaa0] sm:$0xff]
    %v377 = vld [vmem:[%s1 + $0xaa8] sm:$0xff]
    %v378 = vld [vmem:[%s1 + $0xab0] sm:$0xff]
    %v379 = vld [vmem:[%s1 + $0xab8] sm:$0xff]
    %v380 = vld [vmem:[%s1 + $0xac0] sm:$0xff]
    %v381 = vld [vmem:[%s1 + $0xac8] sm:$0xff]
    %v382 = vld [vmem:[%s1 + $0xad0] sm:$0xff]
    %v383 = vld [vmem:[%s1 + $0xad8] sm:$0xff]
    %v384 = vld [vmem:[%s1 + $0xae0] sm:$0xff]
    %v385 = vld [vmem:[%s1 + $0xae8] sm:$0xff]
    %v386 = vld [vmem:[%s1 + $0xaf0] sm:$0xff]
    %v387 = vld [vmem:[%s1 + $0xaf8] sm:$0xff]
    %v388 = vld [vmem:[%s1 + $0xb00] sm:$0xff]
    %v389 = vld [vmem:[%s1 + $0xb08] sm:$0xff]
    %v390 = vld [vmem:[%s1 + $0xb10] sm:$0xff]
    %v391 = vld [vmem:[%s1 + $0xb18] sm:$0xff]
    %v392 = vld [vmem:[%s1 + $0xb20] sm:$0xff]
    %v393 = vld [vmem:[%s1 + $0xb28] sm:$0xff]
    %v394 = vld [vmem:[%s1 + $0xb30] sm:$0xff]
    %v395 = vld [vmem:[%s1 + $0xb38] sm:$0xff]
    %v396 = vld [vmem:[%s1 + $0xb40] sm:$0xff]
    %v397 = vld [vmem:[%s1 + $0xb48] sm:$0xff]
    %v398 = vld [vmem:[%s1 + $0xb50] sm:$0xff]
    %v399 = vld [vmem:[%s1 + $0xb58] sm:$0xff]
    %v400 = vld [vmem:[%s1 + $0xb60] sm:$0xff]
    %v401 = vld [vmem:[%s1 + $0xb68] sm:$0xff]
    %v402 = vld [vmem:[%s1 + $0xb70] sm:$0xff]
    %v403 = vld [vmem:[%s1 + $0xb78] sm:$0xff]
    %v404 = vld [vmem:[%s1 + $0xb80] sm:$0xff]
    %v405 = vld [vmem:[%s1 + $0xb88] sm:$0xff]
    %v406 = vld [vmem:[%s1 + $0xb90] sm:$0xff]
    %v407 = vld [vmem:[%s1 + $0xb98] sm:$0xff]
    %v408 = vld [vmem:[%s1 + $0xba0] sm:$0xff]
    %v409 = vld [vmem:[%s1 + $0xba8] sm:$0xff]
    %v410 = vld [vmem:[%s1 + $0xbb0] sm:$0xff]
    %v411 = vld [vmem:[%s1 + $0xbb8] sm:$0xff]
    %v412 = vld [vmem:[%s1 + $0xbc0] sm:$0xff]
    %v413 = vld [vmem:[%s1 + $0xbc8] sm:$0xff]
    %v414 = vld [vmem:[%s1 + $0xbd0] sm:$0xff]
    %v415 = vld [vmem:[%s1 + $0xbd8] sm:$0xff]
    %v416 = vld [vmem:[%s1 + $0xbe0] sm:$0xff]
    %v417 = vld [vmem:[%s1 + $0xbe8] sm:$0xff]
    %v418 = vld [vmem:[%s1 + $0xbf0] sm:$0xff]
    %v419 = vld [vmem:[%s1 + $0xbf8] sm:$0xff]
    %v426 = vcombine.high %v30, %v30
    %v428 = vunpack.c.l.s4 1983009808
    %v429 = vunpack.c.0.s8 %v428
    %v430 = vlaneseq
    %v431 = vshrl.u32 %v430, 7
    %v432 = vsub.s32 %v429, %v431
    %v433 = vrot.slane %v30, %v432
    %v435 = vunpack.c.l.s4 1983009808
    %v436 = vunpack.c.0.s8 %v435
    %v437 = vlaneseq
    %v438 = vshrl.u32 %v437, 7
    %v439 = vsub.s32 %v436, %v438
    %v440 = vrot.slane %v426, %v439
    %v441 = vcombine.high %v433, %v433
    %v442 = vcombine.high %v440, %v440
    %v443 = vcombine.high %v31, %v31
    %v445 = vunpack.c.l.s4 1983009808
    %v446 = vunpack.c.0.s8 %v445
    %v447 = vlaneseq
    %v448 = vshrl.u32 %v447, 7
    %v449 = vsub.s32 %v446, %v448
    %v450 = vrot.slane %v31, %v449
    %v452 = vunpack.c.l.s4 1983009808
    %v453 = vunpack.c.0.s8 %v452
    %v454 = vlaneseq
    %v455 = vshrl.u32 %v454, 7
    %v456 = vsub.s32 %v453, %v455
    %v457 = vrot.slane %v443, %v456
    %v458 = vcombine.high %v450, %v450
    %v459 = vcombine.high %v457, %v457
    %v460 = vcombine.high %v32, %v32
    %v462 = vunpack.c.l.s4 1983009808
    %v463 = vunpack.c.0.s8 %v462
    %v464 = vlaneseq
    %v465 = vshrl.u32 %v464, 7
    %v466 = vsub.s32 %v463, %v465
    %v467 = vrot.slane %v32, %v466
    %v469 = vunpack.c.l.s4 1983009808
    %v470 = vunpack.c.0.s8 %v469
    %v471 = vlaneseq
    %v472 = vshrl.u32 %v471, 7
    %v473 = vsub.s32 %v470, %v472
    %v474 = vrot.slane %v460, %v473
    %v475 = vcombine.high %v467, %v467
    %v476 = vcombine.high %v474, %v474
    %v477 = vcombine.high %v33, %v33
    %v479 = vunpack.c.l.s4 1983009808
    %v480 = vunpack.c.0.s8 %v479
    %v481 = vlaneseq
    %v482 = vshrl.u32 %v481, 7
    %v483 = vsub.s32 %v480, %v482
    %v484 = vrot.slane %v33, %v483
    %v486 = vunpack.c.l.s4 1983009808
    %v487 = vunpack.c.0.s8 %v486
    %v488 = vlaneseq
    %v489 = vshrl.u32 %v488, 7
    %v490 = vsub.s32 %v487, %v489
    %v491 = vrot.slane %v477, %v490
    %v492 = vcombine.high %v484, %v484
    %v493 = vcombine.high %v491, %v491
    %v494 = vcombine.high %v34, %v34
    %v496 = vunpack.c.l.s4 1983009808
    %v497 = vunpack.c.0.s8 %v496
    %v498 = vlaneseq
    %v499 = vshrl.u32 %v498, 7
    %v500 = vsub.s32 %v497, %v499
    %v501 = vrot.slane %v34, %v500
    %v503 = vunpack.c.l.s4 1983009808
    %v504 = vunpack.c.0.s8 %v503
    %v505 = vlaneseq
    %v506 = vshrl.u32 %v505, 7
    %v507 = vsub.s32 %v504, %v506
    %v508 = vrot.slane %v494, %v507
    %v509 = vcombine.high %v501, %v501
    %v510 = vcombine.high %v508, %v508
    %v511 = vcombine.high %v35, %v35
    %v513 = vunpack.c.l.s4 1983009808
    %v514 = vunpack.c.0.s8 %v513
    %v515 = vlaneseq
    %v516 = vshrl.u32 %v515, 7
    %v517 = vsub.s32 %v514, %v516
    %v518 = vrot.slane %v35, %v517
    %v520 = vunpack.c.l.s4 1983009808
    %v521 = vunpack.c.0.s8 %v520
    %v522 = vlaneseq
    %v523 = vshrl.u32 %v522, 7
    %v524 = vsub.s32 %v521, %v523
    %v525 = vrot.slane %v511, %v524
    %v526 = vcombine.high %v518, %v518
    %v527 = vcombine.high %v525, %v525
    %552 = vmatprep.subr.mxu0 0.0
    %553 = vmatpush1.msra.mxu0 %v36
    %554 = vmatprep.subr.mxu0 0.0
    %555 = vmatpush1.msra.mxu0 %v37
    %556 = vmatprep.subr.mxu0 0.0
    %557 = vmatpush1.msra.mxu0 %v38
    %558 = vmatprep.subr.mxu0 0.0
    %559 = vmatpush1.msra.mxu0 %v39
    %560 = vmatprep.subr.mxu0 0.0
    %561 = vmatpush1.msra.mxu0 %v40
    %562 = vmatprep.subr.mxu0 0.0
    %563 = vmatpush1.msra.mxu0 %v41
    %564 = vmatprep.subr.mxu0 0.0
    %565 = vmatpush1.msra.mxu0 %v42
    %566 = vmatprep.subr.mxu0 0.0
    %567 = vmatpush1.msra.mxu0 %v43
    %568 = vmatprep.subr.mxu0 0.0
    %569 = vmatpush1.msra.mxu0 %v44
    %570 = vmatprep.subr.mxu0 0.0
    %571 = vmatpush1.msra.mxu0 %v45
    %572 = vmatprep.subr.mxu0 0.0
    %573 = vmatpush1.msra.mxu0 %v46
    %574 = vmatprep.subr.mxu0 0.0
    %575 = vmatpush1.msra.mxu0 %v47
    %576 = vmatprep.subr.mxu0 0.0
    %577 = vmatpush1.msra.mxu0 %v48
    %578 = vmatprep.subr.mxu0 0.0
    %579 = vmatpush1.msra.mxu0 %v49
    %580 = vmatprep.subr.mxu0 0.0
    %581 = vmatpush1.msra.mxu0 %v50
    %582 = vmatprep.subr.mxu0 0.0
    %583 = vmatpush1.msra.mxu0 %v51
    %584 = vmatprep.subr.mxu0 0.0
    %585 = vmatpush1.msra.mxu0 %v52
    %586 = vmatprep.subr.mxu0 0.0
    %587 = vmatpush1.msra.mxu0 %v53
    %588 = vmatprep.subr.mxu0 0.0
    %589 = vmatpush1.msra.mxu0 %v54
    %590 = vmatprep.subr.mxu0 0.0
    %591 = vmatpush1.msra.mxu0 %v55
    %592 = vmatprep.subr.mxu0 0.0
    %593 = vmatpush1.msra.mxu0 %v56
    %594 = vmatprep.subr.mxu0 0.0
    %595 = vmatpush1.msra.mxu0 %v57
    %596 = vmatprep.subr.mxu0 0.0
    %597 = vmatpush1.msra.mxu0 %v58
    %598 = vmatprep.subr.mxu0 0.0
    %599 = vmatpush1.msra.mxu0 %v59
    %600 = vmatprep.subr.mxu0 0.0
    %601 = vmatpush1.msra.mxu0 %v60
    %602 = vmatprep.subr.mxu0 0.0
    %603 = vmatpush1.msra.mxu0 %v61
    %604 = vmatprep.subr.mxu0 0.0
    %605 = vmatpush1.msra.mxu0 %v62
    %606 = vmatprep.subr.mxu0 0.0
    %607 = vmatpush1.msra.mxu0 %v63
    %608 = vmatprep.subr.mxu0 0.0
    %609 = vmatpush1.msra.mxu0 %v64
    %610 = vmatprep.subr.mxu0 0.0
    %611 = vmatpush1.msra.mxu0 %v65
    %612 = vmatprep.subr.mxu0 0.0
    %613 = vmatpush1.msra.mxu0 %v66
    %614 = vmatprep.subr.mxu0 0.0
    %615 = vmatpush1.msra.mxu0 %v67
    %616 = vmatprep.mubr.f32.mxu0 %v441
    %617 = vmatmul.mubr.f32.gmra.mrb[0].mxu0 %v433
    %v618 = vpop.f32.mrb[0].mxu0
    %v619 = vadd.f32 0.0, %v618
    %v620 = vpop.f32.mrb[0].mxu0
    %621 = vdwg.mxu0
    %622 = vmatprep.subr.mxu0 0.0
    %623 = vmatpush1.msra.mxu0 %v68
    %624 = vmatprep.subr.mxu0 0.0
    %625 = vmatpush1.msra.mxu0 %v69
    %626 = vmatprep.subr.mxu0 0.0
    %627 = vmatpush1.msra.mxu0 %v70
    %628 = vmatprep.subr.mxu0 0.0
    %629 = vmatpush1.msra.mxu0 %v71
    %630 = vmatprep.subr.mxu0 0.0
    %631 = vmatpush1.msra.mxu0 %v72
    %632 = vmatprep.subr.mxu0 0.0
    %633 = vmatpush1.msra.mxu0 %v73
    %634 = vmatprep.subr.mxu0 0.0
    %635 = vmatpush1.msra.mxu0 %v74
    %636 = vmatprep.subr.mxu0 0.0
    %637 = vmatpush1.msra.mxu0 %v75
    %638 = vmatprep.subr.mxu0 0.0
    %639 = vmatpush1.msra.mxu0 %v76
    %640 = vmatprep.subr.mxu0 0.0
    %641 = vmatpush1.msra.mxu0 %v77
    %642 = vmatprep.subr.mxu0 0.0
    %643 = vmatpush1.msra.mxu0 %v78
    %644 = vmatprep.subr.mxu0 0.0
    %645 = vmatpush1.msra.mxu0 %v79
    %646 = vmatprep.subr.mxu0 0.0
    %647 = vmatpush1.msra.mxu0 %v80
    %648 = vmatprep.subr.mxu0 0.0
    %649 = vmatpush1.msra.mxu0 %v81
    %650 = vmatprep.subr.mxu0 0.0
    %651 = vmatpush1.msra.mxu0 %v82
    %652 = vmatprep.subr.mxu0 0.0
    %653 = vmatpush1.msra.mxu0 %v83
    %654 = vmatprep.subr.mxu0 0.0
    %655 = vmatpush1.msra.mxu0 %v84
    %656 = vmatprep.subr.mxu0 0.0
    %657 = vmatpush1.msra.mxu0 %v85
    %658 = vmatprep.subr.mxu0 0.0
    %659 = vmatpush1.msra.mxu0 %v86
    %660 = vmatprep.subr.mxu0 0.0
    %661 = vmatpush1.msra.mxu0 %v87
    %662 = vmatprep.subr.mxu0 0.0
    %663 = vmatpush1.msra.mxu0 %v88
    %664 = vmatprep.subr.mxu0 0.0
    %665 = vmatpush1.msra.mxu0 %v89
    %666 = vmatprep.subr.mxu0 0.0
    %667 = vmatpush1.msra.mxu0 %v90
    %668 = vmatprep.subr.mxu0 0.0
    %669 = vmatpush1.msra.mxu0 %v91
    %670 = vmatprep.subr.mxu0 0.0
    %671 = vmatpush1.msra.mxu0 %v92
    %672 = vmatprep.subr.mxu0 0.0
    %673 = vmatpush1.msra.mxu0 %v93
    %674 = vmatprep.subr.mxu0 0.0
    %675 = vmatpush1.msra.mxu0 %v94
    %676 = vmatprep.subr.mxu0 0.0
    %677 = vmatpush1.msra.mxu0 %v95
    %678 = vmatprep.subr.mxu0 0.0
    %679 = vmatpush1.msra.mxu0 %v96
    %680 = vmatprep.subr.mxu0 0.0
    %681 = vmatpush1.msra.mxu0 %v97
    %682 = vmatprep.subr.mxu0 0.0
    %683 = vmatpush1.msra.mxu0 %v98
    %684 = vmatprep.subr.mxu0 0.0
    %685 = vmatpush1.msra.mxu0 %v99
    %686 = vmatprep.mubr.f32.mxu0 %v442
    %687 = vmatmul.mubr.f32.gmra.mrb[0].mxu0 %v440
    %v688 = vpop.f32.mrb[0].mxu0
    %v689 = vadd.f32 %v619, %v688
    %v690 = vpop.f32.mrb[0].mxu0
    %691 = vdwg.mxu0
    %692 = vmatprep.subr.mxu0 0.0
    %693 = vmatpush1.msra.mxu0 %v100
    %694 = vmatprep.subr.mxu0 0.0
    %695 = vmatpush1.msra.mxu0 %v101
    %696 = vmatprep.subr.mxu0 0.0
    %697 = vmatpush1.msra.mxu0 %v102
    %698 = vmatprep.subr.mxu0 0.0
    %699 = vmatpush1.msra.mxu0 %v103
    %700 = vmatprep.subr.mxu0 0.0
    %701 = vmatpush1.msra.mxu0 %v104
    %702 = vmatprep.subr.mxu0 0.0
    %703 = vmatpush1.msra.mxu0 %v105
    %704 = vmatprep.subr.mxu0 0.0
    %705 = vmatpush1.msra.mxu0 %v106
    %706 = vmatprep.subr.mxu0 0.0
    %707 = vmatpush1.msra.mxu0 %v107
    %708 = vmatprep.subr.mxu0 0.0
    %709 = vmatpush1.msra.mxu0 %v108
    %710 = vmatprep.subr.mxu0 0.0
    %711 = vmatpush1.msra.mxu0 %v109
    %712 = vmatprep.subr.mxu0 0.0
    %713 = vmatpush1.msra.mxu0 %v110
    %714 = vmatprep.subr.mxu0 0.0
    %715 = vmatpush1.msra.mxu0 %v111
    %716 = vmatprep.subr.mxu0 0.0
    %717 = vmatpush1.msra.mxu0 %v112
    %718 = vmatprep.subr.mxu0 0.0
    %719 = vmatpush1.msra.mxu0 %v113
    %720 = vmatprep.subr.mxu0 0.0
    %721 = vmatpush1.msra.mxu0 %v114
    %722 = vmatprep.subr.mxu0 0.0
    %723 = vmatpush1.msra.mxu0 %v115
    %724 = vmatprep.subr.mxu0 0.0
    %725 = vmatpush1.msra.mxu0 %v116
    %726 = vmatprep.subr.mxu0 0.0
    %727 = vmatpush1.msra.mxu0 %v117
    %728 = vmatprep.subr.mxu0 0.0
    %729 = vmatpush1.msra.mxu0 %v118
    %730 = vmatprep.subr.mxu0 0.0
    %731 = vmatpush1.msra.mxu0 %v119
    %732 = vmatprep.subr.mxu0 0.0
    %733 = vmatpush1.msra.mxu0 %v120
    %734 = vmatprep.subr.mxu0 0.0
    %735 = vmatpush1.msra.mxu0 %v121
    %736 = vmatprep.subr.mxu0 0.0
    %737 = vmatpush1.msra.mxu0 %v122
    %738 = vmatprep.subr.mxu0 0.0
    %739 = vmatpush1.msra.mxu0 %v123
    %740 = vmatprep.subr.mxu0 0.0
    %741 = vmatpush1.msra.mxu0 %v124
    %742 = vmatprep.subr.mxu0 0.0
    %743 = vmatpush1.msra.mxu0 %v125
    %744 = vmatprep.subr.mxu0 0.0
    %745 = vmatpush1.msra.mxu0 %v126
    %746 = vmatprep.subr.mxu0 0.0
    %747 = vmatpush1.msra.mxu0 %v127
    %748 = vmatprep.subr.mxu0 0.0
    %749 = vmatpush1.msra.mxu0 %v128
    %750 = vmatprep.subr.mxu0 0.0
    %751 = vmatpush1.msra.mxu0 %v129
    %752 = vmatprep.subr.mxu0 0.0
    %753 = vmatpush1.msra.mxu0 %v130
    %754 = vmatprep.subr.mxu0 0.0
    %755 = vmatpush1.msra.mxu0 %v131
    %756 = vmatprep.mubr.f32.mxu0 %v458
    %757 = vmatmul.mubr.f32.gmra.mrb[0].mxu0 %v450
    %v758 = vpop.f32.mrb[0].mxu0
    %v759 = vadd.f32 %v689, %v758
    %v760 = vpop.f32.mrb[0].mxu0
    %761 = vdwg.mxu0
    %762 = vmatprep.subr.mxu0 0.0
    %763 = vmatpush1.msra.mxu0 %v132
    %764 = vmatprep.subr.mxu0 0.0
    %765 = vmatpush1.msra.mxu0 %v133
    %766 = vmatprep.subr.mxu0 0.0
    %767 = vmatpush1.msra.mxu0 %v134
    %768 = vmatprep.subr.mxu0 0.0
    %769 = vmatpush1.msra.mxu0 %v135
    %770 = vmatprep.subr.mxu0 0.0
    %771 = vmatpush1.msra.mxu0 %v136
    %772 = vmatprep.subr.mxu0 0.0
    %773 = vmatpush1.msra.mxu0 %v137
    %774 = vmatprep.subr.mxu0 0.0
    %775 = vmatpush1.msra.mxu0 %v138
    %776 = vmatprep.subr.mxu0 0.0
    %777 = vmatpush1.msra.mxu0 %v139
    %778 = vmatprep.subr.mxu0 0.0
    %779 = vmatpush1.msra.mxu0 %v140
    %780 = vmatprep.subr.mxu0 0.0
    %781 = vmatpush1.msra.mxu0 %v141
    %782 = vmatprep.subr.mxu0 0.0
    %783 = vmatpush1.msra.mxu0 %v142
    %784 = vmatprep.subr.mxu0 0.0
    %785 = vmatpush1.msra.mxu0 %v143
    %786 = vmatprep.subr.mxu0 0.0
    %787 = vmatpush1.msra.mxu0 %v144
    %788 = vmatprep.subr.mxu0 0.0
    %789 = vmatpush1.msra.mxu0 %v145
    %790 = vmatprep.subr.mxu0 0.0
    %791 = vmatpush1.msra.mxu0 %v146
    %792 = vmatprep.subr.mxu0 0.0
    %793 = vmatpush1.msra.mxu0 %v147
    %794 = vmatprep.subr.mxu0 0.0
    %795 = vmatpush1.msra.mxu0 %v148
    %796 = vmatprep.subr.mxu0 0.0
    %797 = vmatpush1.msra.mxu0 %v149
    %798 = vmatprep.subr.mxu0 0.0
    %799 = vmatpush1.msra.mxu0 %v150
    %800 = vmatprep.subr.mxu0 0.0
    %801 = vmatpush1.msra.mxu0 %v151
    %802 = vmatprep.subr.mxu0 0.0
    %803 = vmatpush1.msra.mxu0 %v152
    %804 = vmatprep.subr.mxu0 0.0
    %805 = vmatpush1.msra.mxu0 %v153
    %806 = vmatprep.subr.mxu0 0.0
    %807 = vmatpush1.msra.mxu0 %v154
    %808 = vmatprep.subr.mxu0 0.0
    %809 = vmatpush1.msra.mxu0 %v155
    %810 = vmatprep.subr.mxu0 0.0
    %811 = vmatpush1.msra.mxu0 %v156
    %812 = vmatprep.subr.mxu0 0.0
    %813 = vmatpush1.msra.mxu0 %v157
    %814 = vmatprep.subr.mxu0 0.0
    %815 = vmatpush1.msra.mxu0 %v158
    %816 = vmatprep.subr.mxu0 0.0
    %817 = vmatpush1.msra.mxu0 %v159
    %818 = vmatprep.subr.mxu0 0.0
    %819 = vmatpush1.msra.mxu0 %v160
    %820 = vmatprep.subr.mxu0 0.0
    %821 = vmatpush1.msra.mxu0 %v161
    %822 = vmatprep.subr.mxu0 0.0
    %823 = vmatpush1.msra.mxu0 %v162
    %824 = vmatprep.subr.mxu0 0.0
    %825 = vmatpush1.msra.mxu0 %v163
    %826 = vmatprep.mubr.f32.mxu0 %v459
    %827 = vmatmul.mubr.f32.gmra.mrb[0].mxu0 %v457
    %v828 = vpop.f32.mrb[0].mxu0
    %v829 = vadd.f32 %v759, %v828
    %v830 = vpop.f32.mrb[0].mxu0
    %831 = vdwg.mxu0
    %832 = vmatprep.subr.mxu0 0.0
    %833 = vmatpush1.msra.mxu0 %v164
    %834 = vmatprep.subr.mxu0 0.0
    %835 = vmatpush1.msra.mxu0 %v165
    %836 = vmatprep.subr.mxu0 0.0
    %837 = vmatpush1.msra.mxu0 %v166
    %838 = vmatprep.subr.mxu0 0.0
    %839 = vmatpush1.msra.mxu0 %v167
    %840 = vmatprep.subr.mxu0 0.0
    %841 = vmatpush1.msra.mxu0 %v168
    %842 = vmatprep.subr.mxu0 0.0
    %843 = vmatpush1.msra.mxu0 %v169
    %844 = vmatprep.subr.mxu0 0.0
    %845 = vmatpush1.msra.mxu0 %v170
    %846 = vmatprep.subr.mxu0 0.0
    %847 = vmatpush1.msra.mxu0 %v171
    %848 = vmatprep.subr.mxu0 0.0
    %849 = vmatpush1.msra.mxu0 %v172
    %850 = vmatprep.subr.mxu0 0.0
    %851 = vmatpush1.msra.mxu0 %v173
    %852 = vmatprep.subr.mxu0 0.0
    %853 = vmatpush1.msra.mxu0 %v174
    %854 = vmatprep.subr.mxu0 0.0
    %855 = vmatpush1.msra.mxu0 %v175
    %856 = vmatprep.subr.mxu0 0.0
    %857 = vmatpush1.msra.mxu0 %v176
    %858 = vmatprep.subr.mxu0 0.0
    %859 = vmatpush1.msra.mxu0 %v177
    %860 = vmatprep.subr.mxu0 0.0
    %861 = vmatpush1.msra.mxu0 %v178
    %862 = vmatprep.subr.mxu0 0.0
    %863 = vmatpush1.msra.mxu0 %v179
    %864 = vmatprep.subr.mxu0 0.0
    %865 = vmatpush1.msra.mxu0 %v180
    %866 = vmatprep.subr.mxu0 0.0
    %867 = vmatpush1.msra.mxu0 %v181
    %868 = vmatprep.subr.mxu0 0.0
    %869 = vmatpush1.msra.mxu0 %v182
    %870 = vmatprep.subr.mxu0 0.0
    %871 = vmatpush1.msra.mxu0 %v183
    %872 = vmatprep.subr.mxu0 0.0
    %873 = vmatpush1.msra.mxu0 %v184
    %874 = vmatprep.subr.mxu0 0.0
    %875 = vmatpush1.msra.mxu0 %v185
    %876 = vmatprep.subr.mxu0 0.0
    %877 = vmatpush1.msra.mxu0 %v186
    %878 = vmatprep.subr.mxu0 0.0
    %879 = vmatpush1.msra.mxu0 %v187
    %880 = vmatprep.subr.mxu0 0.0
    %881 = vmatpush1.msra.mxu0 %v188
    %882 = vmatprep.subr.mxu0 0.0
    %883 = vmatpush1.msra.mxu0 %v189
    %884 = vmatprep.subr.mxu0 0.0
    %885 = vmatpush1.msra.mxu0 %v190
    %886 = vmatprep.subr.mxu0 0.0
    %887 = vmatpush1.msra.mxu0 %v191
    %888 = vmatprep.subr.mxu0 0.0
    %889 = vmatpush1.msra.mxu0 %v192
    %890 = vmatprep.subr.mxu0 0.0
    %891 = vmatpush1.msra.mxu0 %v193
    %892 = vmatprep.subr.mxu0 0.0
    %893 = vmatpush1.msra.mxu0 %v194
    %894 = vmatprep.subr.mxu0 0.0
    %895 = vmatpush1.msra.mxu0 %v195
    %896 = vmatprep.mubr.f32.mxu0 %v475
    %897 = vmatmul.mubr.f32.gmra.mrb[0].mxu0 %v467
    %v898 = vpop.f32.mrb[0].mxu0
    %v899 = vadd.f32 %v829, %v898
    %v900 = vpop.f32.mrb[0].mxu0
    %901 = vdwg.mxu0
    %902 = vmatprep.subr.mxu0 0.0
    %903 = vmatpush1.msra.mxu0 %v196
    %904 = vmatprep.subr.mxu0 0.0
    %905 = vmatpush1.msra.mxu0 %v197
    %906 = vmatprep.subr.mxu0 0.0
    %907 = vmatpush1.msra.mxu0 %v198
    %908 = vmatprep.subr.mxu0 0.0
    %909 = vmatpush1.msra.mxu0 %v199
    %910 = vmatprep.subr.mxu0 0.0
    %911 = vmatpush1.msra.mxu0 %v200
    %912 = vmatprep.subr.mxu0 0.0
    %913 = vmatpush1.msra.mxu0 %v201
    %914 = vmatprep.subr.mxu0 0.0
    %915 = vmatpush1.msra.mxu0 %v202
    %916 = vmatprep.subr.mxu0 0.0
    %917 = vmatpush1.msra.mxu0 %v203
    %918 = vmatprep.subr.mxu0 0.0
    %919 = vmatpush1.msra.mxu0 %v204
    %920 = vmatprep.subr.mxu0 0.0
    %921 = vmatpush1.msra.mxu0 %v205
    %922 = vmatprep.subr.mxu0 0.0
    %923 = vmatpush1.msra.mxu0 %v206
    %924 = vmatprep.subr.mxu0 0.0
    %925 = vmatpush1.msra.mxu0 %v207
    %926 = vmatprep.subr.mxu0 0.0
    %927 = vmatpush1.msra.mxu0 %v208
    %928 = vmatprep.subr.mxu0 0.0
    %929 = vmatpush1.msra.mxu0 %v209
    %930 = vmatprep.subr.mxu0 0.0
    %931 = vmatpush1.msra.mxu0 %v210
    %932 = vmatprep.subr.mxu0 0.0
    %933 = vmatpush1.msra.mxu0 %v211
    %934 = vmatprep.subr.mxu0 0.0
    %935 = vmatpush1.msra.mxu0 %v212
    %936 = vmatprep.subr.mxu0 0.0
    %937 = vmatpush1.msra.mxu0 %v213
    %938 = vmatprep.subr.mxu0 0.0
    %939 = vmatpush1.msra.mxu0 %v214
    %940 = vmatprep.subr.mxu0 0.0
    %941 = vmatpush1.msra.mxu0 %v215
    %942 = vmatprep.subr.mxu0 0.0
    %943 = vmatpush1.msra.mxu0 %v216
    %944 = vmatprep.subr.mxu0 0.0
    %945 = vmatpush1.msra.mxu0 %v217
    %946 = vmatprep.subr.mxu0 0.0
    %947 = vmatpush1.msra.mxu0 %v218
    %948 = vmatprep.subr.mxu0 0.0
    %949 = vmatpush1.msra.mxu0 %v219
    %950 = vmatprep.subr.mxu0 0.0
    %951 = vmatpush1.msra.mxu0 %v220
    %952 = vmatprep.subr.mxu0 0.0
    %953 = vmatpush1.msra.mxu0 %v221
    %954 = vmatprep.subr.mxu0 0.0
    %955 = vmatpush1.msra.mxu0 %v222
    %956 = vmatprep.subr.mxu0 0.0
    %957 = vmatpush1.msra.mxu0 %v223
    %958 = vmatprep.subr.mxu0 0.0
    %959 = vmatpush1.msra.mxu0 %v224
    %960 = vmatprep.subr.mxu0 0.0
    %961 = vmatpush1.msra.mxu0 %v225
    %962 = vmatprep.subr.mxu0 0.0
    %963 = vmatpush1.msra.mxu0 %v226
    %964 = vmatprep.subr.mxu0 0.0
    %965 = vmatpush1.msra.mxu0 %v227
    %966 = vmatprep.mubr.f32.mxu0 %v476
    %967 = vmatmul.mubr.f32.gmra.mrb[0].mxu0 %v474
    %v968 = vpop.f32.mrb[0].mxu0
    %v969 = vadd.f32 %v899, %v968
    %v970 = vpop.f32.mrb[0].mxu0
    %971 = vdwg.mxu0
    %972 = vmatprep.subr.mxu0 0.0
    %973 = vmatpush1.msra.mxu0 %v228
    %974 = vmatprep.subr.mxu0 0.0
    %975 = vmatpush1.msra.mxu0 %v229
    %976 = vmatprep.subr.mxu0 0.0
    %977 = vmatpush1.msra.mxu0 %v230
    %978 = vmatprep.subr.mxu0 0.0
    %979 = vmatpush1.msra.mxu0 %v231
    %980 = vmatprep.subr.mxu0 0.0
    %981 = vmatpush1.msra.mxu0 %v232
    %982 = vmatprep.subr.mxu0 0.0
    %983 = vmatpush1.msra.mxu0 %v233
    %984 = vmatprep.subr.mxu0 0.0
    %985 = vmatpush1.msra.mxu0 %v234
    %986 = vmatprep.subr.mxu0 0.0
    %987 = vmatpush1.msra.mxu0 %v235
    %988 = vmatprep.subr.mxu0 0.0
    %989 = vmatpush1.msra.mxu0 %v236
    %990 = vmatprep.subr.mxu0 0.0
    %991 = vmatpush1.msra.mxu0 %v237
    %992 = vmatprep.subr.mxu0 0.0
    %993 = vmatpush1.msra.mxu0 %v238
    %994 = vmatprep.subr.mxu0 0.0
    %995 = vmatpush1.msra.mxu0 %v239
    %996 = vmatprep.subr.mxu0 0.0
    %997 = vmatpush1.msra.mxu0 %v240
    %998 = vmatprep.subr.mxu0 0.0
    %999 = vmatpush1.msra.mxu0 %v241
    %1000 = vmatprep.subr.mxu0 0.0
    %1001 = vmatpush1.msra.mxu0 %v242
    %1002 = vmatprep.subr.mxu0 0.0
    %1003 = vmatpush1.msra.mxu0 %v243
    %1004 = vmatprep.subr.mxu0 0.0
    %1005 = vmatpush1.msra.mxu0 %v244
    %1006 = vmatprep.subr.mxu0 0.0
    %1007 = vmatpush1.msra.mxu0 %v245
    %1008 = vmatprep.subr.mxu0 0.0
    %1009 = vmatpush1.msra.mxu0 %v246
    %1010 = vmatprep.subr.mxu0 0.0
    %1011 = vmatpush1.msra.mxu0 %v247
    %1012 = vmatprep.subr.mxu0 0.0
    %1013 = vmatpush1.msra.mxu0 %v248
    %1014 = vmatprep.subr.mxu0 0.0
    %1015 = vmatpush1.msra.mxu0 %v249
    %1016 = vmatprep.subr.mxu0 0.0
    %1017 = vmatpush1.msra.mxu0 %v250
    %1018 = vmatprep.subr.mxu0 0.0
    %1019 = vmatpush1.msra.mxu0 %v251
    %1020 = vmatprep.subr.mxu0 0.0
    %1021 = vmatpush1.msra.mxu0 %v252
    %1022 = vmatprep.subr.mxu0 0.0
    %1023 = vmatpush1.msra.mxu0 %v253
    %1024 = vmatprep.subr.mxu0 0.0
    %1025 = vmatpush1.msra.mxu0 %v254
    %1026 = vmatprep.subr.mxu0 0.0
    %1027 = vmatpush1.msra.mxu0 %v255
    %1028 = vmatprep.subr.mxu0 0.0
    %1029 = vmatpush1.msra.mxu0 %v256
    %1030 = vmatprep.subr.mxu0 0.0
    %1031 = vmatpush1.msra.mxu0 %v257
    %1032 = vmatprep.subr.mxu0 0.0
    %1033 = vmatpush1.msra.mxu0 %v258
    %1034 = vmatprep.subr.mxu0 0.0
    %1035 = vmatpush1.msra.mxu0 %v259
    %1036 = vmatprep.mubr.f32.mxu0 %v492
    %1037 = vmatmul.mubr.f32.gmra.mrb[0].mxu0 %v484
    %v1038 = vpop.f32.mrb[0].mxu0
    %v1039 = vadd.f32 %v969, %v1038
    %v1040 = vpop.f32.mrb[0].mxu0
    %1041 = vdwg.mxu0
    %1042 = vmatprep.subr.mxu0 0.0
    %1043 = vmatpush1.msra.mxu0 %v260
    %1044 = vmatprep.subr.mxu0 0.0
    %1045 = vmatpush1.msra.mxu0 %v261
    %1046 = vmatprep.subr.mxu0 0.0
    %1047 = vmatpush1.msra.mxu0 %v262
    %1048 = vmatprep.subr.mxu0 0.0
    %1049 = vmatpush1.msra.mxu0 %v263
    %1050 = vmatprep.subr.mxu0 0.0
    %1051 = vmatpush1.msra.mxu0 %v264
    %1052 = vmatprep.subr.mxu0 0.0
    %1053 = vmatpush1.msra.mxu0 %v265
    %1054 = vmatprep.subr.mxu0 0.0
    %1055 = vmatpush1.msra.mxu0 %v266
    %1056 = vmatprep.subr.mxu0 0.0
    %1057 = vmatpush1.msra.mxu0 %v267
    %1058 = vmatprep.subr.mxu0 0.0
    %1059 = vmatpush1.msra.mxu0 %v268
    %1060 = vmatprep.subr.mxu0 0.0
    %1061 = vmatpush1.msra.mxu0 %v269
    %1062 = vmatprep.subr.mxu0 0.0
    %1063 = vmatpush1.msra.mxu0 %v270
    %1064 = vmatprep.subr.mxu0 0.0
    %1065 = vmatpush1.msra.mxu0 %v271
    %1066 = vmatprep.subr.mxu0 0.0
    %1067 = vmatpush1.msra.mxu0 %v272
    %1068 = vmatprep.subr.mxu0 0.0
    %1069 = vmatpush1.msra.mxu0 %v273
    %1070 = vmatprep.subr.mxu0 0.0
    %1071 = vmatpush1.msra.mxu0 %v274
    %1072 = vmatprep.subr.mxu0 0.0
    %1073 = vmatpush1.msra.mxu0 %v275
    %1074 = vmatprep.subr.mxu0 0.0
    %1075 = vmatpush1.msra.mxu0 %v276
    %1076 = vmatprep.subr.mxu0 0.0
    %1077 = vmatpush1.msra.mxu0 %v277
    %1078 = vmatprep.subr.mxu0 0.0
    %1079 = vmatpush1.msra.mxu0 %v278
    %1080 = vmatprep.subr.mxu0 0.0
    %1081 = vmatpush1.msra.mxu0 %v279
    %1082 = vmatprep.subr.mxu0 0.0
    %1083 = vmatpush1.msra.mxu0 %v280
    %1084 = vmatprep.subr.mxu0 0.0
    %1085 = vmatpush1.msra.mxu0 %v281
    %1086 = vmatprep.subr.mxu0 0.0
    %1087 = vmatpush1.msra.mxu0 %v282
    %1088 = vmatprep.subr.mxu0 0.0
    %1089 = vmatpush1.msra.mxu0 %v283
    %1090 = vmatprep.subr.mxu0 0.0
    %1091 = vmatpush1.msra.mxu0 %v284
    %1092 = vmatprep.subr.mxu0 0.0
    %1093 = vmatpush1.msra.mxu0 %v285
    %1094 = vmatprep.subr.mxu0 0.0
    %1095 = vmatpush1.msra.mxu0 %v286
    %1096 = vmatprep.subr.mxu0 0.0
    %1097 = vmatpush1.msra.mxu0 %v287
    %1098 = vmatprep.subr.mxu0 0.0
    %1099 = vmatpush1.msra.mxu0 %v288
    %1100 = vmatprep.subr.mxu0 0.0
    %1101 = vmatpush1.msra.mxu0 %v289
    %1102 = vmatprep.subr.mxu0 0.0
    %1103 = vmatpush1.msra.mxu0 %v290
    %1104 = vmatprep.subr.mxu0 0.0
    %1105 = vmatpush1.msra.mxu0 %v291
    %1106 = vmatprep.mubr.f32.mxu0 %v493
    %1107 = vmatmul.mubr.f32.gmra.mrb[0].mxu0 %v491
    %v1108 = vpop.f32.mrb[0].mxu0
    %v1109 = vadd.f32 %v1039, %v1108
    %v1110 = vpop.f32.mrb[0].mxu0
    %1111 = vdwg.mxu0
    %1112 = vmatprep.subr.mxu0 0.0
    %1113 = vmatpush1.msra.mxu0 %v292
    %1114 = vmatprep.subr.mxu0 0.0
    %1115 = vmatpush1.msra.mxu0 %v293
    %1116 = vmatprep.subr.mxu0 0.0
    %1117 = vmatpush1.msra.mxu0 %v294
    %1118 = vmatprep.subr.mxu0 0.0
    %1119 = vmatpush1.msra.mxu0 %v295
    %1120 = vmatprep.subr.mxu0 0.0
    %1121 = vmatpush1.msra.mxu0 %v296
    %1122 = vmatprep.subr.mxu0 0.0
    %1123 = vmatpush1.msra.mxu0 %v297
    %1124 = vmatprep.subr.mxu0 0.0
    %1125 = vmatpush1.msra.mxu0 %v298
    %1126 = vmatprep.subr.mxu0 0.0
    %1127 = vmatpush1.msra.mxu0 %v299
    %1128 = vmatprep.subr.mxu0 0.0
    %1129 = vmatpush1.msra.mxu0 %v300
    %1130 = vmatprep.subr.mxu0 0.0
    %1131 = vmatpush1.msra.mxu0 %v301
    %1132 = vmatprep.subr.mxu0 0.0
    %1133 = vmatpush1.msra.mxu0 %v302
    %1134 = vmatprep.subr.mxu0 0.0
    %1135 = vmatpush1.msra.mxu0 %v303
    %1136 = vmatprep.subr.mxu0 0.0
    %1137 = vmatpush1.msra.mxu0 %v304
    %1138 = vmatprep.subr.mxu0 0.0
    %1139 = vmatpush1.msra.mxu0 %v305
    %1140 = vmatprep.subr.mxu0 0.0
    %1141 = vmatpush1.msra.mxu0 %v306
    %1142 = vmatprep.subr.mxu0 0.0
    %1143 = vmatpush1.msra.mxu0 %v307
    %1144 = vmatprep.subr.mxu0 0.0
    %1145 = vmatpush1.msra.mxu0 %v308
    %1146 = vmatprep.subr.mxu0 0.0
    %1147 = vmatpush1.msra.mxu0 %v309
    %1148 = vmatprep.subr.mxu0 0.0
    %1149 = vmatpush1.msra.mxu0 %v310
    %1150 = vmatprep.subr.mxu0 0.0
    %1151 = vmatpush1.msra.mxu0 %v311
    %1152 = vmatprep.subr.mxu0 0.0
    %1153 = vmatpush1.msra.mxu0 %v312
    %1154 = vmatprep.subr.mxu0 0.0
    %1155 = vmatpush1.msra.mxu0 %v313
    %1156 = vmatprep.subr.mxu0 0.0
    %1157 = vmatpush1.msra.mxu0 %v314
    %1158 = vmatprep.subr.mxu0 0.0
    %1159 = vmatpush1.msra.mxu0 %v315
    %1160 = vmatprep.subr.mxu0 0.0
    %1161 = vmatpush1.msra.mxu0 %v316
    %1162 = vmatprep.subr.mxu0 0.0
    %1163 = vmatpush1.msra.mxu0 %v317
    %1164 = vmatprep.subr.mxu0 0.0
    %1165 = vmatpush1.msra.mxu0 %v318
    %1166 = vmatprep.subr.mxu0 0.0
    %1167 = vmatpush1.msra.mxu0 %v319
    %1168 = vmatprep.subr.mxu0 0.0
    %1169 = vmatpush1.msra.mxu0 %v320
    %1170 = vmatprep.subr.mxu0 0.0
    %1171 = vmatpush1.msra.mxu0 %v321
    %1172 = vmatprep.subr.mxu0 0.0
    %1173 = vmatpush1.msra.mxu0 %v322
    %1174 = vmatprep.subr.mxu0 0.0
    %1175 = vmatpush1.msra.mxu0 %v323
    %1176 = vmatprep.mubr.f32.mxu0 %v509
    %1177 = vmatmul.mubr.f32.gmra.mrb[0].mxu0 %v501
    %v1178 = vpop.f32.mrb[0].mxu0
    %v1179 = vadd.f32 %v1109, %v1178
    %v1180 = vpop.f32.mrb[0].mxu0
    %1181 = vdwg.mxu0
    %1182 = vmatprep.subr.mxu0 0.0
    %1183 = vmatpush1.msra.mxu0 %v324
    %1184 = vmatprep.subr.mxu0 0.0
    %1185 = vmatpush1.msra.mxu0 %v325
    %1186 = vmatprep.subr.mxu0 0.0
    %1187 = vmatpush1.msra.mxu0 %v326
    %1188 = vmatprep.subr.mxu0 0.0
    %1189 = vmatpush1.msra.mxu0 %v327
    %1190 = vmatprep.subr.mxu0 0.0
    %1191 = vmatpush1.msra.mxu0 %v328
    %1192 = vmatprep.subr.mxu0 0.0
    %1193 = vmatpush1.msra.mxu0 %v329
    %1194 = vmatprep.subr.mxu0 0.0
    %1195 = vmatpush1.msra.mxu0 %v330
    %1196 = vmatprep.subr.mxu0 0.0
    %1197 = vmatpush1.msra.mxu0 %v331
    %1198 = vmatprep.subr.mxu0 0.0
    %1199 = vmatpush1.msra.mxu0 %v332
    %1200 = vmatprep.subr.mxu0 0.0
    %1201 = vmatpush1.msra.mxu0 %v333
    %1202 = vmatprep.subr.mxu0 0.0
    %1203 = vmatpush1.msra.mxu0 %v334
    %1204 = vmatprep.subr.mxu0 0.0
    %1205 = vmatpush1.msra.mxu0 %v335
    %1206 = vmatprep.subr.mxu0 0.0
    %1207 = vmatpush1.msra.mxu0 %v336
    %1208 = vmatprep.subr.mxu0 0.0
    %1209 = vmatpush1.msra.mxu0 %v337
    %1210 = vmatprep.subr.mxu0 0.0
    %1211 = vmatpush1.msra.mxu0 %v338
    %1212 = vmatprep.subr.mxu0 0.0
    %1213 = vmatpush1.msra.mxu0 %v339
    %1214 = vmatprep.subr.mxu0 0.0
    %1215 = vmatpush1.msra.mxu0 %v340
    %1216 = vmatprep.subr.mxu0 0.0
    %1217 = vmatpush1.msra.mxu0 %v341
    %1218 = vmatprep.subr.mxu0 0.0
    %1219 = vmatpush1.msra.mxu0 %v342
    %1220 = vmatprep.subr.mxu0 0.0
    %1221 = vmatpush1.msra.mxu0 %v343
    %1222 = vmatprep.subr.mxu0 0.0
    %1223 = vmatpush1.msra.mxu0 %v344
    %1224 = vmatprep.subr.mxu0 0.0
    %1225 = vmatpush1.msra.mxu0 %v345
    %1226 = vmatprep.subr.mxu0 0.0
    %1227 = vmatpush1.msra.mxu0 %v346
    %1228 = vmatprep.subr.mxu0 0.0
    %1229 = vmatpush1.msra.mxu0 %v347
    %1230 = vmatprep.subr.mxu0 0.0
    %1231 = vmatpush1.msra.mxu0 %v348
    %1232 = vmatprep.subr.mxu0 0.0
    %1233 = vmatpush1.msra.mxu0 %v349
    %1234 = vmatprep.subr.mxu0 0.0
    %1235 = vmatpush1.msra.mxu0 %v350
    %1236 = vmatprep.subr.mxu0 0.0
    %1237 = vmatpush1.msra.mxu0 %v351
    %1238 = vmatprep.subr.mxu0 0.0
    %1239 = vmatpush1.msra.mxu0 %v352
    %1240 = vmatprep.subr.mxu0 0.0
    %1241 = vmatpush1.msra.mxu0 %v353
    %1242 = vmatprep.subr.mxu0 0.0
    %1243 = vmatpush1.msra.mxu0 %v354
    %1244 = vmatprep.subr.mxu0 0.0
    %1245 = vmatpush1.msra.mxu0 %v355
    %1246 = vmatprep.mubr.f32.mxu0 %v510
    %1247 = vmatmul.mubr.f32.gmra.mrb[0].mxu0 %v508
    %v1248 = vpop.f32.mrb[0].mxu0
    %v1249 = vadd.f32 %v1179, %v1248
    %v1250 = vpop.f32.mrb[0].mxu0
    %1251 = vdwg.mxu0
    %1252 = vmatprep.subr.mxu0 0.0
    %1253 = vmatpush1.msra.mxu0 %v356
    %1254 = vmatprep.subr.mxu0 0.0
    %1255 = vmatpush1.msra.mxu0 %v357
    %1256 = vmatprep.subr.mxu0 0.0
    %1257 = vmatpush1.msra.mxu0 %v358
    %1258 = vmatprep.subr.mxu0 0.0
    %1259 = vmatpush1.msra.mxu0 %v359
    %1260 = vmatprep.subr.mxu0 0.0
    %1261 = vmatpush1.msra.mxu0 %v360
    %1262 = vmatprep.subr.mxu0 0.0
    %1263 = vmatpush1.msra.mxu0 %v361
    %1264 = vmatprep.subr.mxu0 0.0
    %1265 = vmatpush1.msra.mxu0 %v362
    %1266 = vmatprep.subr.mxu0 0.0
    %1267 = vmatpush1.msra.mxu0 %v363
    %1268 = vmatprep.subr.mxu0 0.0
    %1269 = vmatpush1.msra.mxu0 %v364
    %1270 = vmatprep.subr.mxu0 0.0
    %1271 = vmatpush1.msra.mxu0 %v365
    %1272 = vmatprep.subr.mxu0 0.0
    %1273 = vmatpush1.msra.mxu0 %v366
    %1274 = vmatprep.subr.mxu0 0.0
    %1275 = vmatpush1.msra.mxu0 %v367
    %1276 = vmatprep.subr.mxu0 0.0
    %1277 = vmatpush1.msra.mxu0 %v368
    %1278 = vmatprep.subr.mxu0 0.0
    %1279 = vmatpush1.msra.mxu0 %v369
    %1280 = vmatprep.subr.mxu0 0.0
    %1281 = vmatpush1.msra.mxu0 %v370
    %1282 = vmatprep.subr.mxu0 0.0
    %1283 = vmatpush1.msra.mxu0 %v371
    %1284 = vmatprep.subr.mxu0 0.0
    %1285 = vmatpush1.msra.mxu0 %v372
    %1286 = vmatprep.subr.mxu0 0.0
    %1287 = vmatpush1.msra.mxu0 %v373
    %1288 = vmatprep.subr.mxu0 0.0
    %1289 = vmatpush1.msra.mxu0 %v374
    %1290 = vmatprep.subr.mxu0 0.0
    %1291 = vmatpush1.msra.mxu0 %v375
    %1292 = vmatprep.subr.mxu0 0.0
    %1293 = vmatpush1.msra.mxu0 %v376
    %1294 = vmatprep.subr.mxu0 0.0
    %1295 = vmatpush1.msra.mxu0 %v377
    %1296 = vmatprep.subr.mxu0 0.0
    %1297 = vmatpush1.msra.mxu0 %v378
    %1298 = vmatprep.subr.mxu0 0.0
    %1299 = vmatpush1.msra.mxu0 %v379
    %1300 = vmatprep.subr.mxu0 0.0
    %1301 = vmatpush1.msra.mxu0 %v380
    %1302 = vmatprep.subr.mxu0 0.0
    %1303 = vmatpush1.msra.mxu0 %v381
    %1304 = vmatprep.subr.mxu0 0.0
    %1305 = vmatpush1.msra.mxu0 %v382
    %1306 = vmatprep.subr.mxu0 0.0
    %1307 = vmatpush1.msra.mxu0 %v383
    %1308 = vmatprep.subr.mxu0 0.0
    %1309 = vmatpush1.msra.mxu0 %v384
    %1310 = vmatprep.subr.mxu0 0.0
    %1311 = vmatpush1.msra.mxu0 %v385
    %1312 = vmatprep.subr.mxu0 0.0
    %1313 = vmatpush1.msra.mxu0 %v386
    %1314 = vmatprep.subr.mxu0 0.0
    %1315 = vmatpush1.msra.mxu0 %v387
    %1316 = vmatprep.mubr.f32.mxu0 %v526
    %1317 = vmatmul.mubr.f32.gmra.mrb[0].mxu0 %v518
    %v1318 = vpop.f32.mrb[0].mxu0
    %v1319 = vadd.f32 %v1249, %v1318
    %v1320 = vpop.f32.mrb[0].mxu0
    %1321 = vdwg.mxu0
    %1322 = vmatprep.subr.mxu0 0.0
    %1323 = vmatpush1.msra.mxu0 %v388
    %1324 = vmatprep.subr.mxu0 0.0
    %1325 = vmatpush1.msra.mxu0 %v389
    %1326 = vmatprep.subr.mxu0 0.0
    %1327 = vmatpush1.msra.mxu0 %v390
    %1328 = vmatprep.subr.mxu0 0.0
    %1329 = vmatpush1.msra.mxu0 %v391
    %1330 = vmatprep.subr.mxu0 0.0
    %1331 = vmatpush1.msra.mxu0 %v392
    %1332 = vmatprep.subr.mxu0 0.0
    %1333 = vmatpush1.msra.mxu0 %v393
    %1334 = vmatprep.subr.mxu0 0.0
    %1335 = vmatpush1.msra.mxu0 %v394
    %1336 = vmatprep.subr.mxu0 0.0
    %1337 = vmatpush1.msra.mxu0 %v395
    %1338 = vmatprep.subr.mxu0 0.0
    %1339 = vmatpush1.msra.mxu0 %v396
    %1340 = vmatprep.subr.mxu0 0.0
    %1341 = vmatpush1.msra.mxu0 %v397
    %1342 = vmatprep.subr.mxu0 0.0
    %1343 = vmatpush1.msra.mxu0 %v398
    %1344 = vmatprep.subr.mxu0 0.0
    %1345 = vmatpush1.msra.mxu0 %v399
    %1346 = vmatprep.subr.mxu0 0.0
    %1347 = vmatpush1.msra.mxu0 %v400
    %1348 = vmatprep.subr.mxu0 0.0
    %1349 = vmatpush1.msra.mxu0 %v401
    %1350 = vmatprep.subr.mxu0 0.0
    %1351 = vmatpush1.msra.mxu0 %v402
    %1352 = vmatprep.subr.mxu0 0.0
    %1353 = vmatpush1.msra.mxu0 %v403
    %1354 = vmatprep.subr.mxu0 0.0
    %1355 = vmatpush1.msra.mxu0 %v404
    %1356 = vmatprep.subr.mxu0 0.0
    %1357 = vmatpush1.msra.mxu0 %v405
    %1358 = vmatprep.subr.mxu0 0.0
    %1359 = vmatpush1.msra.mxu0 %v406
    %1360 = vmatprep.subr.mxu0 0.0
    %1361 = vmatpush1.msra.mxu0 %v407
    %1362 = vmatprep.subr.mxu0 0.0
    %1363 = vmatpush1.msra.mxu0 %v408
    %1364 = vmatprep.subr.mxu0 0.0
    %1365 = vmatpush1.msra.mxu0 %v409
    %1366 = vmatprep.subr.mxu0 0.0
    %1367 = vmatpush1.msra.mxu0 %v410
    %1368 = vmatprep.subr.mxu0 0.0
    %1369 = vmatpush1.msra.mxu0 %v411
    %1370 = vmatprep.subr.mxu0 0.0
    %1371 = vmatpush1.msra.mxu0 %v412
    %1372 = vmatprep.subr.mxu0 0.0
    %1373 = vmatpush1.msra.mxu0 %v413
    %1374 = vmatprep.subr.mxu0 0.0
    %1375 = vmatpush1.msra.mxu0 %v414
    %1376 = vmatprep.subr.mxu0 0.0
    %1377 = vmatpush1.msra.mxu0 %v415
    %1378 = vmatprep.subr.mxu0 0.0
    %1379 = vmatpush1.msra.mxu0 %v416
    %1380 = vmatprep.subr.mxu0 0.0
    %1381 = vmatpush1.msra.mxu0 %v417
    %1382 = vmatprep.subr.mxu0 0.0
    %1383 = vmatpush1.msra.mxu0 %v418
    %1384 = vmatprep.subr.mxu0 0.0
    %1385 = vmatpush1.msra.mxu0 %v419
    %1386 = vmatprep.mubr.f32.mxu0 %v527
    %1387 = vmatmul.mubr.f32.gmra.mrb[0].mxu0 %v525
    %v1388 = vpop.f32.mrb[0].mxu0
    %v1389 = vadd.f32 %v1319, %v1388
    %v1390 = vpop.f32.mrb[0].mxu0
    %1391 = vdwg.mxu0
    %v1392 = vadd.f32 %v29, %v1389
    %vm1393 = vcmask 123904
    %1394 = vst.msk [vmem:[#allocation2] sm:$0x3] %vm1393, %v1392
    // Predicated region
    $region26: #{tpu_custom_call.1} parent=1 // pred_check
      %p1395 = pneg %p23
    $region27: #{tpu_custom_call.1} parent=1 // pred_check_branch
      %1397 = sbr.rel (%p1395) target = $region29
    $region28: #{tpu_custom_call.1} parent=1 // pred_region
      %v1398 = vld [vmem:[#allocation2] sm:$0x3]
      %v1399 = vmul.f32 %v1398, 0.00390625
      %v1400 = vld [vmem:[%s2] sm:$0x1]
      %v1402 = vlaneseq
      %v1403 = vshrl.u32 %v1402, 7
      %v1404 = vsub.s32 0, %v1403
      %v1405 = vrot.slane %v1400, %v1404
      %v1407 = vadd.f32 %v1399, %v1405
      %v1408 = vsub.f32 %v1407, 5.6
      %v1409 = vmax.f32 %v1408, 0.0
      %v1410 = vld [vmem:[%s3] sm:$0xff]
      %v1411 = vld [vmem:[%s3 + $0x8] sm:$0xff]
      %vm1412 = vcmask 130048
      %v1414 = vsel %vm1412, %v1409, 0
      %1416 = vmatprep.subr.mxu0 0.0
      %1417 = vmatpush1.msra.mxu0 %v1410
      %1418 = vmatprep.subr.mxu0 0.0
      %1419 = vmatpush1.msra.mxu0 %v1411
      %1420 = vmatprep.subr.mxu0 0.0
      %1421 = vmatpush1.msra.mxu0 0.0
      %1422 = vmatprep.subr.mxu0 0.0
      %1423 = vmatpush1.msra.mxu0 0.0
      %1424 = vmatprep.subr.mxu0 0.0
      %1425 = vmatpush1.msra.mxu0 0.0
      %1426 = vmatprep.subr.mxu0 0.0
      %1427 = vmatpush1.msra.mxu0 0.0
      %1428 = vmatprep.subr.mxu0 0.0
      %1429 = vmatpush1.msra.mxu0 0.0
      %1430 = vmatprep.subr.mxu0 0.0
      %1431 = vmatpush1.msra.mxu0 0.0
      %1432 = vmatprep.subr.mxu0 0.0
      %1433 = vmatpush1.msra.mxu0 0.0
      %1434 = vmatprep.subr.mxu0 0.0
      %1435 = vmatpush1.msra.mxu0 0.0
      %1436 = vmatprep.subr.mxu0 0.0
      %1437 = vmatpush1.msra.mxu0 0.0
      %1438 = vmatprep.subr.mxu0 0.0
      %1439 = vmatpush1.msra.mxu0 0.0
      %1440 = vmatprep.subr.mxu0 0.0
      %1441 = vmatpush1.msra.mxu0 0.0
      %1442 = vmatprep.subr.mxu0 0.0
      %1443 = vmatpush1.msra.mxu0 0.0
      %1444 = vmatprep.subr.mxu0 0.0
      %1445 = vmatpush1.msra.mxu0 0.0
      %1446 = vmatprep.subr.mxu0 0.0
      %1447 = vmatpush1.msra.mxu0 0.0
      %1448 = vmatprep.subr.mxu0 0.0
      %1449 = vmatpush1.msra.mxu0 0.0
      %1450 = vmatprep.subr.mxu0 0.0
      %1451 = vmatpush1.msra.mxu0 0.0
      %1452 = vmatprep.subr.mxu0 0.0
      %1453 = vmatpush1.msra.mxu0 0.0
      %1454 = vmatprep.subr.mxu0 0.0
      %1455 = vmatpush1.msra.mxu0 0.0
      %1456 = vmatprep.subr.mxu0 0.0
      %1457 = vmatpush1.msra.mxu0 0.0
      %1458 = vmatprep.subr.mxu0 0.0
      %1459 = vmatpush1.msra.mxu0 0.0
      %1460 = vmatprep.subr.mxu0 0.0
      %1461 = vmatpush1.msra.mxu0 0.0
      %1462 = vmatprep.subr.mxu0 0.0
      %1463 = vmatpush1.msra.mxu0 0.0
      %1464 = vmatprep.subr.mxu0 0.0
      %1465 = vmatpush1.msra.mxu0 0.0
      %1466 = vmatprep.subr.mxu0 0.0
      %1467 = vmatpush1.msra.mxu0 0.0
      %1468 = vmatprep.subr.mxu0 0.0
      %1469 = vmatpush1.msra.mxu0 0.0
      %1470 = vmatprep.subr.mxu0 0.0
      %1471 = vmatpush1.msra.mxu0 0.0
      %1472 = vmatprep.subr.mxu0 0.0
      %1473 = vmatpush1.msra.mxu0 0.0
      %1474 = vmatprep.subr.mxu0 0.0
      %1475 = vmatpush1.msra.mxu0 0.0
      %1476 = vmatprep.subr.mxu0 0.0
      %1477 = vmatpush1.msra.mxu0 0.0
      %1478 = vmatprep.subr.mxu0 0.0
      %1479 = vmatpush1.msra.mxu0 0.0
      %1480 = vmatprep.mubr.f32.mxu0 0.0
      %1481 = vmatmul.mubr.f32.gmra.mrb[0].mxu0 %v1414
      %v1482 = vpop.f32.mrb[0].mxu0
      %v1483 = vadd.f32 0.0, %v1482
      %v1484 = vpop.f32.mrb[0].mxu0
      %1485 = vdwg.mxu0
      %vm1486 = vcmask 1024
      %v1487 = vsel %vm1486, %v1483, 0.0
      %v1488 = vrot.slane %v1487, 4
      %v1489 = vadd.f32 %v1487, %v1488
      %v1490 = vrot.slane %v1489, 2
      %v1491 = vadd.f32 %v1489, %v1490
      %v1492 = vrot.slane %v1491, 1
      %v1493 = vadd.f32 %v1491, %v1492
      %v1494 = vld [vmem:[#allocation3] sm:$0x1]
      %v1495 = vmul.f32 %v1494, 2.0
      %v1496 = vadd.f32 %v1493, %v1495
      %v1497 = vmul.f32 %v1496, 0.0625
      %v1498 = vsub.f32 %v1497, 7.0
      %v1499 = vmax.f32 %v1498, 0.0
      %vm1500 = vcmask 0
      %1501 = vst.msk [vmem:[#allocation4] sm:$0x1] %vm1500, %v1499
    $region29: #{tpu_custom_call.1} parent=1 // pred_fallthru
      _
    // Predicated region
    $region30: #{tpu_custom_call.1} parent=1 // pred_check
      _
    $region31: #{tpu_custom_call.1} parent=1 // pred_check_branch
      %1503 = sbr.rel (0) target = $region33
    $region32: #{tpu_custom_call.1} parent=1 // pred_region
      %s1505 = ssub.s32 16, 16
      %1506 = vsyncadd [#allocation5], %s1505
      %s1508 = sshll.u32 [#allocation4], 4
      %s1509 = int_to_ptr.vmem [resolvable:$true] %s1508
      %1511 = dma.vmem_to_hbm [thread:$0]  %s1509, 16, %s5, [#allocation5]
    $region33: #{tpu_custom_call.1} parent=1 // pred_fallthru
      _
    // Predicated region
    $region34: #{tpu_custom_call.1} parent=1 // pred_check
      _
    $region35: #{tpu_custom_call.1} parent=1 // pred_check_branch
      %1513 = sbr.rel (0) target = $region37
    $region36: #{tpu_custom_call.1} parent=1 // pred_region
      %1514 = dma.done [#allocation5], 16
    $region37: #{tpu_custom_call.1} parent=1 // pred_fallthru
      _
    %1515 = vsyncpa [#allocation5], 1

</llo_original>
